<compile_context>
chip_gen: v5e
topology: v5e:2x2
jax: 0.10.0
libtpu: 0.0.40
codegen_flags: <defaults>
</compile_context>

<pallas_src>
import functools

import jax
import jax.numpy as jnp
from jax import lax
from jax.experimental import pallas as pl
from jax.experimental.pallas import tpu as pltpu


# ----------------------------- Pallas kernel --------------------------------
def gru_chunk_kernel(x_ref, wih_ref, bih_ref, whh_ref, bhn_ref, out_ref, h_ref,
                     *, tt, hp, emit_seq):
    """Run `tt` GRU timesteps per grid step (PyTorch nn.GRU semantics).

    x_ref  : (bb, tt, E)    input time-chunk (bf16)
    wih_ref: (E, 3*hp)      input->gates weights (bf16), gates [r|z|n] at
                            128-lane-aligned offsets
    bih_ref: (1, 3*hp)      b_ih with b_hh(r,z) folded in (f32)
    whh_ref: (hp, 3*hp)     hidden->gates weights (bf16)
    bhn_ref: (1, hp)        n-gate hidden bias (f32, must stay inside r*(...))
    out_ref: (bb, tt, hp) bf16 if emit_seq else (bb, hp) f32 resident output
    h_ref  : (bb, hp)       VMEM scratch carrying h_{t-1} across time chunks
    """
    c = pl.program_id(1)          # time-chunk index (sequential axis)

    @pl.when(c == 0)
    def _():
        h_ref[...] = jnp.zeros_like(h_ref)  # PyTorch default h0 = 0

    bb = h_ref.shape[0]
    wih = wih_ref[...]                                            # bf16 resident
    whh = whh_ref[...]                                            # bf16 resident
    # Hoist bias broadcasts out of the unrolled time loop (no CSE of bcast).
    bih = jnp.broadcast_to(bih_ref[...].astype(jnp.float32), (bb, 3 * hp))
    bhn = jnp.broadcast_to(bhn_ref[...].astype(jnp.float32), (bb, hp))

    h = h_ref[...]                                                # (bb, hp) f32
    # Statically unrolled inner time loop (tt <= 16) -> all slices static.
    for j in range(tt):
        xj = x_ref[:, j, :].astype(jnp.bfloat16)                  # (bb, E)
        # fused input projection (independent of h -> overlaps with recurrence)
        gi = jnp.dot(xj, wih, preferred_element_type=jnp.float32) + bih
        # single fused hidden-gate matmul (bf16 operands, f32 accumulation)
        gh = jnp.dot(h.astype(jnp.bfloat16), whh,
                     preferred_element_type=jnp.float32)          # (bb, 3hp)
        # lane-aligned gate slices (each starts at a multiple of 128)
        r = jax.nn.sigmoid(gi[:, 0:hp] + gh[:, 0:hp])
        z = jax.nn.sigmoid(gi[:, hp:2 * hp] + gh[:, hp:2 * hp])
        # r gates the *hidden* branch of n (PyTorch convention); b_hn kept here
        n = jnp.tanh(gi[:, 2 * hp:3 * hp] + r * (gh[:, 2 * hp:3 * hp] + bhn))
        h = (1.0 - z) * n + z * h
        if emit_seq:
            out_ref[:, j, :] = h.astype(out_ref.dtype)

    h_ref[...] = h
    if not emit_seq:
        # Resident (bb, hp) output: write only on the final time chunk.
        @pl.when(c == pl.num_programs(1) - 1)
        def _():
            out_ref[...] = h.astype(out_ref.dtype)


# ------------------------------- Tiling helpers ------------------------------
def _round_up(x, m):
    return (x + m - 1) // m * m


def _pick_tt(T, max_unroll=16):
    """Timesteps per grid step: full block if small, else a /8 divisor <= 16."""
    if T <= max_unroll:
        return T
    for tt in (16, 8):
        if T % tt == 0:
            return tt
    if T <= 32:
        return T
    # TODO(synk): ragged T (no multiple-of-8 divisor) needs a masked last block.
    raise ValueError(f"unsupported sequence length {T}")


def _pick_bb(B):
    """Batch block: full batch if small, else a multiple-of-8 divisor."""
    if B <= 8:
        return B
    for bb in (32, 16, 8):
        if B % bb == 0:
            return bb
    return B


# ------------------------------ Layer launcher --------------------------------
def gru_layer(x, wih_cat, bih_fold, whh_cat, bhn, *, emit_seq):
    """One GRU layer (input projection fused in-kernel).

    x: (B, T, E) bf16.  Returns (B, T, Hp) bf16 if emit_seq else (B, Hp) f32.
    """
    B, T, E = x.shape
    HP3 = wih_cat.shape[1]
    HP = HP3 // 3
    tt = _pick_tt(T)
    bb = _pick_bb(B)
    grid = (B // bb, T // tt)

    kernel = functools.partial(gru_chunk_kernel, tt=tt, hp=HP, emit_seq=emit_seq)

    if emit_seq:
        out_shape = jax.ShapeDtypeStruct((B, T, HP), jnp.bfloat16)
        out_spec = pl.BlockSpec((bb, tt, HP), lambda b, c: (b, c, 0))
    else:
        out_shape = jax.ShapeDtypeStruct((B, HP), jnp.float32)
        out_spec = pl.BlockSpec((bb, HP), lambda b, c: (b, 0))

    return pl.pallas_call(
        kernel,
        out_shape=out_shape,
        grid_spec=pltpu.PrefetchScalarGridSpec(
            num_scalar_prefetch=0,
            grid=grid,
            in_specs=[
                pl.BlockSpec((bb, tt, E), lambda b, c: (b, c, 0)),  # x time-chunk
                pl.BlockSpec((E, HP3), lambda b, c: (0, 0)),        # W_ih (resident)
                pl.BlockSpec((1, HP3), lambda b, c: (0, 0)),        # b_ih+b_hh(r,z)
                pl.BlockSpec((HP, HP3), lambda b, c: (0, 0)),       # W_hh (resident)
                pl.BlockSpec((1, HP), lambda b, c: (0, 0)),         # b_hn
            ],
            out_specs=out_spec,
            scratch_shapes=[pltpu.VMEM((bb, HP), jnp.float32)],     # carried hidden
        ),
        compiler_params=pltpu.CompilerParams(
            # batch axis parallel (2 TCs on v7x); time axis is a recurrence.
            dimension_semantics=("parallel", "arbitrary"),
            vmem_limit_bytes=48 * 1024 * 1024,
        ),
    )(x, wih_cat, bih_fold, whh_cat, bhn)


# ------------------------------ Module wrapper -------------------------------
@functools.partial(jax.jit, static_argnames=("hidden_size",))
def question_embedding_forward(input_text, embedding, gru_layers, hidden_size):
    """Forward pass equivalent to QuestionEmbeding.forward (inference)."""
    # Embedding lookup (plain JAX gather, glue): (B, T) -> (B, T, E), batch-first.
    x = jnp.take(embedding, input_text, axis=0).astype(jnp.bfloat16)
    n_layers = len(gru_layers)
    for li, (wih_cat, bih_fold, whh_cat, bhn) in enumerate(gru_layers):
        last = li == n_layers - 1
        x = gru_layer(x, wih_cat, bih_fold, whh_cat, bhn, emit_seq=not last)
        # TODO(synk): nn.GRU inter-layer dropout is training-only; omitted (eval).
    return x[:, :hidden_size]  # drop lane padding -> (B, H) == out[:, -1]


# ------------------------------ Parameters -----------------------------------
def init_params(key, num_vocab, embedding_dim, hidden_size, num_layers):
    """nn.Embedding + nn.GRU-shaped params; raw (PyTorch layout) + kernel-packed."""
    H = hidden_size
    HP = _round_up(H, 128)          # lane-aligned hidden size
    keys = jax.random.split(key, 1 + 4 * num_layers)
    k = hidden_size ** -0.5
    params = {
        "embedding": jax.random.normal(keys[0], (num_vocab, embedding_dim), jnp.float32),
        "raw_layers": [],     # PyTorch layout, f32 (reference)
        "kernel_layers": [],  # packed for the kernel
        "hidden_size": H,
        "hidden_pad": HP,
    }
    for layer in range(num_layers):
        e_in = embedding_dim if layer == 0 else hidden_size
        e_pad = embedding_dim if layer == 0 else HP   # layer>0 consumes padded bf16 seq
        kk = keys[1 + 4 * layer: 1 + 4 * (layer + 1)]
        w_ih = jax.random.uniform(kk[0], (3 * H, e_in), jnp.float32, -k, k)
        w_hh = jax.random.uniform(kk[1], (3 * H, H), jnp.float32, -k, k)
        b_ih = jax.random.uniform(kk[2], (3 * H,), jnp.float32, -k, k)
        b_hh = jax.random.uniform(kk[3], (3 * H,), jnp.float32, -k, k)
        params["raw_layers"].append((w_ih, w_hh, b_ih, b_hh))

        # Kernel packing: gates [r|z|n] each at a 128-lane-aligned offset g*HP,
        # hidden/input dims zero-padded.  b_hh(r,z) folded into b_ih; only the
        # n-gate hidden bias survives separately (it sits inside r*(...)).
        wih_cat = jnp.zeros((e_pad, 3 * HP), jnp.float32)
        whh_cat = jnp.zeros((HP, 3 * HP), jnp.float32)
        bih_fold = jnp.zeros((1, 3 * HP), jnp.float32)
        for g in range(3):
            wih_cat = wih_cat.at[:e_in, g * HP:g * HP + H].set(
                jnp.transpose(w_ih[g * H:(g + 1) * H, :]))
            whh_cat = whh_cat.at[:H, g * HP:g * HP + H].set(
                jnp.transpose(w_hh[g * H:(g + 1) * H, :]))
            bg = b_ih[g * H:(g + 1) * H]
            if g < 2:
                bg = bg + b_hh[g * H:(g + 1) * H]   # fold b_hr / b_hz
            bih_fold = bih_fold.at[0, g * HP:g * HP + H].set(bg)
        bhn = jnp.zeros((1, HP), jnp.float32).at[0, :H].set(b_hh[2 * H:3 * H])
        params["kernel_layers"].append(
            (wih_cat.astype(jnp.bfloat16), bih_fold,
             whh_cat.astype(jnp.bfloat16), bhn))
    return params


# ------------------------------ Reference (f32) ------------------------------
def gru_layer_ref(x_bte, w_ih, w_hh, b_ih, b_hh):
    B, T, E = x_bte.shape
    H = w_hh.shape[1]
    x_tbe = jnp.transpose(x_bte, (1, 0, 2))

    def step(h, x):
        gi = x @ w_ih.T + b_ih
        gh = h @ w_hh.T + b_hh
        r = jax.nn.sigmoid(gi[:, :H] + gh[:, :H])
        z = jax.nn.sigmoid(gi[:, H:2 * H] + gh[:, H:2 * H])
        n = jnp.tanh(gi[:, 2 * H:] + r * gh[:, 2 * H:])
        h_new = (1.0 - z) * n + z * h
        return h_new, h_new

    h0 = jnp.zeros((B, H), jnp.float32)
    _, outs = lax.scan(step, h0, x_tbe)
    return jnp.transpose(outs, (1, 0, 2))  # (B, T, H)


def forward_ref(input_text, embedding, raw_layers):
    x = jnp.take(embedding, input_text, axis=0)
    for (w_ih, w_hh, b_ih, b_hh) in raw_layers:
        x = gru_layer_ref(x, w_ih, w_hh, b_ih, b_hh)
    return x[:, -1]


# ---------------------------------- main -------------------------------------
if __name__ == "__main__":
    NUM_VOCAB = 32        # kwargs['num_vocab']
    EMBED_DIM = 16        # kwargs['embedding_dim']
    HIDDEN = 32           # kwargs['LSTM_hidden_size']
    B, T = 2, 8

    key = jax.random.PRNGKey(0)
    k_tok, k_par1, k_par2 = jax.random.split(key, 3)
    input_text = jax.random.randint(k_tok, (B, T), 0, NUM_VOCAB, dtype=jnp.int32)

    # 1-layer GRU (resident last-hidden output path).
    p1 = init_params(k_par1, NUM_VOCAB, EMBED_DIM, HIDDEN, num_layers=1)
    res1 = jax.block_until_ready(
        question_embedding_forward(input_text, p1["embedding"],
                                   p1["kernel_layers"], hidden_size=HIDDEN))
    assert res1.shape == (B, HIDDEN), res1.shape
    ref1 = forward_ref(input_text, p1["embedding"], p1["raw_layers"])
    err1 = float(jnp.max(jnp.abs(res1 - ref1)))
    assert err1 < 3e-2, err1  # bf16 matmul operands -> loosened tolerance

    # 2-layer GRU exercises the bf16 sequence-emitting (inter-layer) path.
    p2 = init_params(k_par2, NUM_VOCAB, EMBED_DIM, HIDDEN, num_layers=2)
    res2 = jax.block_until_ready(
        question_embedding_forward(input_text, p2["embedding"],
                                   p2["kernel_layers"], hidden_size=HIDDEN))
    assert res2.shape == (B, HIDDEN), res2.shape
    ref2 = forward_ref(input_text, p2["embedding"], p2["raw_layers"])
    err2 = float(jnp.max(jnp.abs(res2 - ref2)))
    assert err2 < 4e-2, err2

    print("KERNEL_OK")
</pallas_src>

<mosaic_0001>
module attributes {stable_mosaic.version = 11 : i64} {
  func.func @gru_chunk_kernel(%arg0: i32, %arg1: i32, %arg2: memref<2x8x16xbf16, #tpu.memory_space<vmem>>, %arg3: memref<16x384xbf16, #tpu.memory_space<vmem>>, %arg4: memref<1x384xf32, #tpu.memory_space<vmem>>, %arg5: memref<128x384xbf16, #tpu.memory_space<vmem>>, %arg6: memref<1x128xf32, #tpu.memory_space<vmem>>, %arg7: memref<2x128xf32, #tpu.memory_space<vmem>>, %arg8: memref<2x128xf32, #tpu.memory_space<vmem>>) attributes {dimension_semantics = [#tpu.dimension_semantics<parallel>, #tpu.dimension_semantics<arbitrary>], iteration_bounds = array<i64: 1, 1>, scalar_prefetch = 0 : i64, scratch_operands = 1 : i64, tpu.core_type = #tpu.core_type<tc>, window_params = [{transform_indices = @transform_0, window_bounds = array<i64: 2, 8, 16>}, {pipeline_mode = #tpu.pipeline_mode<synchronous>, transform_indices = @transform_1, window_bounds = array<i64: 16, 384>}, {pipeline_mode = #tpu.pipeline_mode<synchronous>, transform_indices = @transform_2, window_bounds = array<i64: 1, 384>}, {pipeline_mode = #tpu.pipeline_mode<synchronous>, transform_indices = @transform_3, window_bounds = array<i64: 128, 384>}, {pipeline_mode = #tpu.pipeline_mode<synchronous>, transform_indices = @transform_4, window_bounds = array<i64: 1, 128>}, {transform_indices = @transform_5, window_bounds = array<i64: 2, 128>}]} {
    %c0_i32 = arith.constant 0 : i32
    %0 = arith.cmpi eq, %arg1, %c0_i32 : i32
    %1 = arith.extui %0 : i1 to i32
    %c0_i32_0 = arith.constant 0 : i32
    %2 = arith.cmpi ne, %1, %c0_i32_0 : i32
    scf.if %2 {
      %cst_70 = arith.constant 0.000000e+00 : f32
      %280 = vector.broadcast %cst_70 : f32 to vector<2x128xf32>
      %c0_71 = arith.constant 0 : index
      %c0_72 = arith.constant 0 : index
      %281 = vector.load %arg8[%c0_71, %c0_72] : memref<2x128xf32, #tpu.memory_space<vmem>>, vector<2x128xf32>
      tpu.vector_store %arg8[%c0_71, %c0_72], %280 {strides = array<i32>} : memref<2x128xf32, #tpu.memory_space<vmem>>, vector<2x128xf32>,
    } else {
    }
    %c0 = arith.constant 0 : index
    %c0_1 = arith.constant 0 : index
    %3 = vector.load %arg3[%c0, %c0_1] : memref<16x384xbf16, #tpu.memory_space<vmem>>, vector<16x384xbf16>
    %c0_2 = arith.constant 0 : index
    %c0_3 = arith.constant 0 : index
    %4 = vector.load %arg5[%c0_2, %c0_3] : memref<128x384xbf16, #tpu.memory_space<vmem>>, vector<128x384xbf16>
    %c0_4 = arith.constant 0 : index
    %c0_5 = arith.constant 0 : index
    %5 = vector.load %arg4[%c0_4, %c0_5] : memref<1x384xf32, #tpu.memory_space<vmem>>, vector<1x384xf32>
    %6 = vector.shape_cast %5 : vector<1x384xf32> to vector<1x384xf32>
    %7 = vector.broadcast %6 : vector<1x384xf32> to vector<2x384xf32>
    %c0_6 = arith.constant 0 : index
    %c0_7 = arith.constant 0 : index
    %8 = vector.load %arg6[%c0_6, %c0_7] : memref<1x128xf32, #tpu.memory_space<vmem>>, vector<1x128xf32>
    %9 = vector.shape_cast %8 : vector<1x128xf32> to vector<1x128xf32>
    %10 = vector.broadcast %9 : vector<1x128xf32> to vector<2x128xf32>
    %c0_8 = arith.constant 0 : index
    %c0_9 = arith.constant 0 : index
    %11 = vector.load %arg8[%c0_8, %c0_9] : memref<2x128xf32, #tpu.memory_space<vmem>>, vector<2x128xf32>
    %c0_10 = arith.constant 0 : index
    %c0_11 = arith.constant 0 : index
    %c0_12 = arith.constant 0 : index
    %12 = vector.load %arg2[%c0_10, %c0_11, %c0_12] : memref<2x8x16xbf16, #tpu.memory_space<vmem>>, vector<2x1x16xbf16>
    %13 = vector.shape_cast %12 : vector<2x1x16xbf16> to vector<2x16xbf16>
    %cst = arith.constant dense<0.000000e+00> : vector<2x384xf32>
    %14 = tpu.matmul %13, %3, %cst {dimension_numbers = #tpu.dot_dimension_numbers<[1], [0], [0], [1], [0, 0, 1, 1], [], []>} : vector<2x16xbf16>, vector<16x384xbf16>, vector<2x384xf32> -> vector<2x384xf32>
    %15 = arith.addf %14, %7 : vector<2x384xf32>
    %16 = arith.truncf %11 : vector<2x128xf32> to vector<2x128xbf16>
    %cst_13 = arith.constant dense<0.000000e+00> : vector<2x384xf32>
    %17 = tpu.matmul %16, %4, %cst_13 {dimension_numbers = #tpu.dot_dimension_numbers<[1], [0], [0], [1], [0, 0, 1, 1], [], []>} : vector<2x128xbf16>, vector<128x384xbf16>, vector<2x384xf32> -> vector<2x384xf32>
    %18 = vector.extract_strided_slice %15 {offsets = [0, 0], sizes = [2, 128], strides = [1, 1]} : vector<2x384xf32> to vector<2x128xf32>
    %19 = vector.extract_strided_slice %17 {offsets = [0, 0], sizes = [2, 128], strides = [1, 1]} : vector<2x384xf32> to vector<2x128xf32>
    %20 = arith.addf %18, %19 : vector<2x128xf32>
    %21 = arith.negf %20 : vector<2x128xf32>
    %22 = math.exp %21 : vector<2x128xf32>
    %cst_14 = arith.constant 1.000000e+00 : f32
    %23 = vector.broadcast %cst_14 : f32 to vector<2x128xf32>
    %24 = arith.addf %23, %22 : vector<2x128xf32>
    %25 = arith.divf %23, %24 : vector<2x128xf32>
    %26 = vector.extract_strided_slice %15 {offsets = [0, 128], sizes = [2, 128], strides = [1, 1]} : vector<2x384xf32> to vector<2x128xf32>
    %27 = vector.extract_strided_slice %17 {offsets = [0, 128], sizes = [2, 128], strides = [1, 1]} : vector<2x384xf32> to vector<2x128xf32>
    %28 = arith.addf %26, %27 : vector<2x128xf32>
    %29 = arith.negf %28 : vector<2x128xf32>
    %30 = math.exp %29 : vector<2x128xf32>
    %cst_15 = arith.constant 1.000000e+00 : f32
    %31 = vector.broadcast %cst_15 : f32 to vector<2x128xf32>
    %32 = arith.addf %31, %30 : vector<2x128xf32>
    %33 = arith.divf %31, %32 : vector<2x128xf32>
    %34 = vector.extract_strided_slice %15 {offsets = [0, 256], sizes = [2, 128], strides = [1, 1]} : vector<2x384xf32> to vector<2x128xf32>
    %35 = vector.extract_strided_slice %17 {offsets = [0, 256], sizes = [2, 128], strides = [1, 1]} : vector<2x384xf32> to vector<2x128xf32>
    %36 = arith.addf %35, %10 : vector<2x128xf32>
    %37 = arith.mulf %25, %36 : vector<2x128xf32>
    %38 = arith.addf %34, %37 : vector<2x128xf32>
    %39 = math.tanh %38 : vector<2x128xf32>
    %cst_16 = arith.constant 1.000000e+00 : f32
    %40 = vector.broadcast %cst_16 : f32 to vector<2x128xf32>
    %41 = arith.subf %40, %33 : vector<2x128xf32>
    %42 = arith.mulf %41, %39 : vector<2x128xf32>
    %43 = arith.mulf %33, %11 : vector<2x128xf32>
    %44 = arith.addf %42, %43 : vector<2x128xf32>
    %c0_17 = arith.constant 0 : index
    %c1 = arith.constant 1 : index
    %c0_18 = arith.constant 0 : index
    %45 = vector.load %arg2[%c0_17, %c1, %c0_18] : memref<2x8x16xbf16, #tpu.memory_space<vmem>>, vector<2x1x16xbf16>
    %46 = vector.shape_cast %45 : vector<2x1x16xbf16> to vector<2x16xbf16>
    %cst_19 = arith.constant dense<0.000000e+00> : vector<2x384xf32>
    %47 = tpu.matmul %46, %3, %cst_19 {dimension_numbers = #tpu.dot_dimension_numbers<[1], [0], [0], [1], [0, 0, 1, 1], [], []>} : vector<2x16xbf16>, vector<16x384xbf16>, vector<2x384xf32> -> vector<2x384xf32>
    %48 = arith.addf %47, %7 : vector<2x384xf32>
    %49 = arith.truncf %44 : vector<2x128xf32> to vector<2x128xbf16>
    %cst_20 = arith.constant dense<0.000000e+00> : vector<2x384xf32>
    %50 = tpu.matmul %49, %4, %cst_20 {dimension_numbers = #tpu.dot_dimension_numbers<[1], [0], [0], [1], [0, 0, 1, 1], [], []>} : vector<2x128xbf16>, vector<128x384xbf16>, vector<2x384xf32> -> vector<2x384xf32>
    %51 = vector.extract_strided_slice %48 {offsets = [0, 0], sizes = [2, 128], strides = [1, 1]} : vector<2x384xf32> to vector<2x128xf32>
    %52 = vector.extract_strided_slice %50 {offsets = [0, 0], sizes = [2, 128], strides = [1, 1]} : vector<2x384xf32> to vector<2x128xf32>
    %53 = arith.addf %51, %52 : vector<2x128xf32>
    %54 = arith.negf %53 : vector<2x128xf32>
    %55 = math.exp %54 : vector<2x128xf32>
    %cst_21 = arith.constant 1.000000e+00 : f32
    %56 = vector.broadcast %cst_21 : f32 to vector<2x128xf32>
    %57 = arith.addf %56, %55 : vector<2x128xf32>
    %58 = arith.divf %56, %57 : vector<2x128xf32>
    %59 = vector.extract_strided_slice %48 {offsets = [0, 128], sizes = [2, 128], strides = [1, 1]} : vector<2x384xf32> to vector<2x128xf32>
    %60 = vector.extract_strided_slice %50 {offsets = [0, 128], sizes = [2, 128], strides = [1, 1]} : vector<2x384xf32> to vector<2x128xf32>
    %61 = arith.addf %59, %60 : vector<2x128xf32>
    %62 = arith.negf %61 : vector<2x128xf32>
    %63 = math.exp %62 : vector<2x128xf32>
    %cst_22 = arith.constant 1.000000e+00 : f32
    %64 = vector.broadcast %cst_22 : f32 to vector<2x128xf32>
    %65 = arith.addf %64, %63 : vector<2x128xf32>
    %66 = arith.divf %64, %65 : vector<2x128xf32>
    %67 = vector.extract_strided_slice %48 {offsets = [0, 256], sizes = [2, 128], strides = [1, 1]} : vector<2x384xf32> to vector<2x128xf32>
    %68 = vector.extract_strided_slice %50 {offsets = [0, 256], sizes = [2, 128], strides = [1, 1]} : vector<2x384xf32> to vector<2x128xf32>
    %69 = arith.addf %68, %10 : vector<2x128xf32>
    %70 = arith.mulf %58, %69 : vector<2x128xf32>
    %71 = arith.addf %67, %70 : vector<2x128xf32>
    %72 = math.tanh %71 : vector<2x128xf32>
    %cst_23 = arith.constant 1.000000e+00 : f32
    %73 = vector.broadcast %cst_23 : f32 to vector<2x128xf32>
    %74 = arith.subf %73, %66 : vector<2x128xf32>
    %75 = arith.mulf %74, %72 : vector<2x128xf32>
    %76 = arith.mulf %66, %44 : vector<2x128xf32>
    %77 = arith.addf %75, %76 : vector<2x128xf32>
    %c0_24 = arith.constant 0 : index
    %c2 = arith.constant 2 : index
    %c0_25 = arith.constant 0 : index
    %78 = vector.load %arg2[%c0_24, %c2, %c0_25] : memref<2x8x16xbf16, #tpu.memory_space<vmem>>, vector<2x1x16xbf16>
    %79 = vector.shape_cast %78 : vector<2x1x16xbf16> to vector<2x16xbf16>
    %cst_26 = arith.constant dense<0.000000e+00> : vector<2x384xf32>
    %80 = tpu.matmul %79, %3, %cst_26 {dimension_numbers = #tpu.dot_dimension_numbers<[1], [0], [0], [1], [0, 0, 1, 1], [], []>} : vector<2x16xbf16>, vector<16x384xbf16>, vector<2x384xf32> -> vector<2x384xf32>
    %81 = arith.addf %80, %7 : vector<2x384xf32>
    %82 = arith.truncf %77 : vector<2x128xf32> to vector<2x128xbf16>
    %cst_27 = arith.constant dense<0.000000e+00> : vector<2x384xf32>
    %83 = tpu.matmul %82, %4, %cst_27 {dimension_numbers = #tpu.dot_dimension_numbers<[1], [0], [0], [1], [0, 0, 1, 1], [], []>} : vector<2x128xbf16>, vector<128x384xbf16>, vector<2x384xf32> -> vector<2x384xf32>
    %84 = vector.extract_strided_slice %81 {offsets = [0, 0], sizes = [2, 128], strides = [1, 1]} : vector<2x384xf32> to vector<2x128xf32>
    %85 = vector.extract_strided_slice %83 {offsets = [0, 0], sizes = [2, 128], strides = [1, 1]} : vector<2x384xf32> to vector<2x128xf32>
    %86 = arith.addf %84, %85 : vector<2x128xf32>
    %87 = arith.negf %86 : vector<2x128xf32>
    %88 = math.exp %87 : vector<2x128xf32>
    %cst_28 = arith.constant 1.000000e+00 : f32
    %89 = vector.broadcast %cst_28 : f32 to vector<2x128xf32>
    %90 = arith.addf %89, %88 : vector<2x128xf32>
    %91 = arith.divf %89, %90 : vector<2x128xf32>
    %92 = vector.extract_strided_slice %81 {offsets = [0, 128], sizes = [2, 128], strides = [1, 1]} : vector<2x384xf32> to vector<2x128xf32>
    %93 = vector.extract_strided_slice %83 {offsets = [0, 128], sizes = [2, 128], strides = [1, 1]} : vector<2x384xf32> to vector<2x128xf32>
    %94 = arith.addf %92, %93 : vector<2x128xf32>
    %95 = arith.negf %94 : vector<2x128xf32>
    %96 = math.exp %95 : vector<2x128xf32>
    %cst_29 = arith.constant 1.000000e+00 : f32
    %97 = vector.broadcast %cst_29 : f32 to vector<2x128xf32>
    %98 = arith.addf %97, %96 : vector<2x128xf32>
    %99 = arith.divf %97, %98 : vector<2x128xf32>
    %100 = vector.extract_strided_slice %81 {offsets = [0, 256], sizes = [2, 128], strides = [1, 1]} : vector<2x384xf32> to vector<2x128xf32>
    %101 = vector.extract_strided_slice %83 {offsets = [0, 256], sizes = [2, 128], strides = [1, 1]} : vector<2x384xf32> to vector<2x128xf32>
    %102 = arith.addf %101, %10 : vector<2x128xf32>
    %103 = arith.mulf %91, %102 : vector<2x128xf32>
    %104 = arith.addf %100, %103 : vector<2x128xf32>
    %105 = math.tanh %104 : vector<2x128xf32>
    %cst_30 = arith.constant 1.000000e+00 : f32
    %106 = vector.broadcast %cst_30 : f32 to vector<2x128xf32>
    %107 = arith.subf %106, %99 : vector<2x128xf32>
    %108 = arith.mulf %107, %105 : vector<2x128xf32>
    %109 = arith.mulf %99, %77 : vector<2x128xf32>
    %110 = arith.addf %108, %109 : vector<2x128xf32>
    %c0_31 = arith.constant 0 : index
    %c3 = arith.constant 3 : index
    %c0_32 = arith.constant 0 : index
    %111 = vector.load %arg2[%c0_31, %c3, %c0_32] : memref<2x8x16xbf16, #tpu.memory_space<vmem>>, vector<2x1x16xbf16>
    %112 = vector.shape_cast %111 : vector<2x1x16xbf16> to vector<2x16xbf16>
    %cst_33 = arith.constant dense<0.000000e+00> : vector<2x384xf32>
    %113 = tpu.matmul %112, %3, %cst_33 {dimension_numbers = #tpu.dot_dimension_numbers<[1], [0], [0], [1], [0, 0, 1, 1], [], []>} : vector<2x16xbf16>, vector<16x384xbf16>, vector<2x384xf32> -> vector<2x384xf32>
    %114 = arith.addf %113, %7 : vector<2x384xf32>
    %115 = arith.truncf %110 : vector<2x128xf32> to vector<2x128xbf16>
    %cst_34 = arith.constant dense<0.000000e+00> : vector<2x384xf32>
    %116 = tpu.matmul %115, %4, %cst_34 {dimension_numbers = #tpu.dot_dimension_numbers<[1], [0], [0], [1], [0, 0, 1, 1], [], []>} : vector<2x128xbf16>, vector<128x384xbf16>, vector<2x384xf32> -> vector<2x384xf32>
    %117 = vector.extract_strided_slice %114 {offsets = [0, 0], sizes = [2, 128], strides = [1, 1]} : vector<2x384xf32> to vector<2x128xf32>
    %118 = vector.extract_strided_slice %116 {offsets = [0, 0], sizes = [2, 128], strides = [1, 1]} : vector<2x384xf32> to vector<2x128xf32>
    %119 = arith.addf %117, %118 : vector<2x128xf32>
    %120 = arith.negf %119 : vector<2x128xf32>
    %121 = math.exp %120 : vector<2x128xf32>
    %cst_35 = arith.constant 1.000000e+00 : f32
    %122 = vector.broadcast %cst_35 : f32 to vector<2x128xf32>
    %123 = arith.addf %122, %121 : vector<2x128xf32>
    %124 = arith.divf %122, %123 : vector<2x128xf32>
    %125 = vector.extract_strided_slice %114 {offsets = [0, 128], sizes = [2, 128], strides = [1, 1]} : vector<2x384xf32> to vector<2x128xf32>
    %126 = vector.extract_strided_slice %116 {offsets = [0, 128], sizes = [2, 128], strides = [1, 1]} : vector<2x384xf32> to vector<2x128xf32>
    %127 = arith.addf %125, %126 : vector<2x128xf32>
    %128 = arith.negf %127 : vector<2x128xf32>
    %129 = math.exp %128 : vector<2x128xf32>
    %cst_36 = arith.constant 1.000000e+00 : f32
    %130 = vector.broadcast %cst_36 : f32 to vector<2x128xf32>
    %131 = arith.addf %130, %129 : vector<2x128xf32>
    %132 = arith.divf %130, %131 : vector<2x128xf32>
    %133 = vector.extract_strided_slice %114 {offsets = [0, 256], sizes = [2, 128], strides = [1, 1]} : vector<2x384xf32> to vector<2x128xf32>
    %134 = vector.extract_strided_slice %116 {offsets = [0, 256], sizes = [2, 128], strides = [1, 1]} : vector<2x384xf32> to vector<2x128xf32>
    %135 = arith.addf %134, %10 : vector<2x128xf32>
    %136 = arith.mulf %124, %135 : vector<2x128xf32>
    %137 = arith.addf %133, %136 : vector<2x128xf32>
    %138 = math.tanh %137 : vector<2x128xf32>
    %cst_37 = arith.constant 1.000000e+00 : f32
    %139 = vector.broadcast %cst_37 : f32 to vector<2x128xf32>
    %140 = arith.subf %139, %132 : vector<2x128xf32>
    %141 = arith.mulf %140, %138 : vector<2x128xf32>
    %142 = arith.mulf %132, %110 : vector<2x128xf32>
    %143 = arith.addf %141, %142 : vector<2x128xf32>
    %c0_38 = arith.constant 0 : index
    %c4 = arith.constant 4 : index
    %c0_39 = arith.constant 0 : index
    %144 = vector.load %arg2[%c0_38, %c4, %c0_39] : memref<2x8x16xbf16, #tpu.memory_space<vmem>>, vector<2x1x16xbf16>
    %145 = vector.shape_cast %144 : vector<2x1x16xbf16> to vector<2x16xbf16>
    %cst_40 = arith.constant dense<0.000000e+00> : vector<2x384xf32>
    %146 = tpu.matmul %145, %3, %cst_40 {dimension_numbers = #tpu.dot_dimension_numbers<[1], [0], [0], [1], [0, 0, 1, 1], [], []>} : vector<2x16xbf16>, vector<16x384xbf16>, vector<2x384xf32> -> vector<2x384xf32>
    %147 = arith.addf %146, %7 : vector<2x384xf32>
    %148 = arith.truncf %143 : vector<2x128xf32> to vector<2x128xbf16>
    %cst_41 = arith.constant dense<0.000000e+00> : vector<2x384xf32>
    %149 = tpu.matmul %148, %4, %cst_41 {dimension_numbers = #tpu.dot_dimension_numbers<[1], [0], [0], [1], [0, 0, 1, 1], [], []>} : vector<2x128xbf16>, vector<128x384xbf16>, vector<2x384xf32> -> vector<2x384xf32>
    %150 = vector.extract_strided_slice %147 {offsets = [0, 0], sizes = [2, 128], strides = [1, 1]} : vector<2x384xf32> to vector<2x128xf32>
    %151 = vector.extract_strided_slice %149 {offsets = [0, 0], sizes = [2, 128], strides = [1, 1]} : vector<2x384xf32> to vector<2x128xf32>
    %152 = arith.addf %150, %151 : vector<2x128xf32>
    %153 = arith.negf %152 : vector<2x128xf32>
    %154 = math.exp %153 : vector<2x128xf32>
    %cst_42 = arith.constant 1.000000e+00 : f32
    %155 = vector.broadcast %cst_42 : f32 to vector<2x128xf32>
    %156 = arith.addf %155, %154 : vector<2x128xf32>
    %157 = arith.divf %155, %156 : vector<2x128xf32>
    %158 = vector.extract_strided_slice %147 {offsets = [0, 128], sizes = [2, 128], strides = [1, 1]} : vector<2x384xf32> to vector<2x128xf32>
    %159 = vector.extract_strided_slice %149 {offsets = [0, 128], sizes = [2, 128], strides = [1, 1]} : vector<2x384xf32> to vector<2x128xf32>
    %160 = arith.addf %158, %159 : vector<2x128xf32>
    %161 = arith.negf %160 : vector<2x128xf32>
    %162 = math.exp %161 : vector<2x128xf32>
    %cst_43 = arith.constant 1.000000e+00 : f32
    %163 = vector.broadcast %cst_43 : f32 to vector<2x128xf32>
    %164 = arith.addf %163, %162 : vector<2x128xf32>
    %165 = arith.divf %163, %164 : vector<2x128xf32>
    %166 = vector.extract_strided_slice %147 {offsets = [0, 256], sizes = [2, 128], strides = [1, 1]} : vector<2x384xf32> to vector<2x128xf32>
    %167 = vector.extract_strided_slice %149 {offsets = [0, 256], sizes = [2, 128], strides = [1, 1]} : vector<2x384xf32> to vector<2x128xf32>
    %168 = arith.addf %167, %10 : vector<2x128xf32>
    %169 = arith.mulf %157, %168 : vector<2x128xf32>
    %170 = arith.addf %166, %169 : vector<2x128xf32>
    %171 = math.tanh %170 : vector<2x128xf32>
    %cst_44 = arith.constant 1.000000e+00 : f32
    %172 = vector.broadcast %cst_44 : f32 to vector<2x128xf32>
    %173 = arith.subf %172, %165 : vector<2x128xf32>
    %174 = arith.mulf %173, %171 : vector<2x128xf32>
    %175 = arith.mulf %165, %143 : vector<2x128xf32>
    %176 = arith.addf %174, %175 : vector<2x128xf32>
    %c0_45 = arith.constant 0 : index
    %c5 = arith.constant 5 : index
    %c0_46 = arith.constant 0 : index
    %177 = vector.load %arg2[%c0_45, %c5, %c0_46] : memref<2x8x16xbf16, #tpu.memory_space<vmem>>, vector<2x1x16xbf16>
    %178 = vector.shape_cast %177 : vector<2x1x16xbf16> to vector<2x16xbf16>
    %cst_47 = arith.constant dense<0.000000e+00> : vector<2x384xf32>
    %179 = tpu.matmul %178, %3, %cst_47 {dimension_numbers = #tpu.dot_dimension_numbers<[1], [0], [0], [1], [0, 0, 1, 1], [], []>} : vector<2x16xbf16>, vector<16x384xbf16>, vector<2x384xf32> -> vector<2x384xf32>
    %180 = arith.addf %179, %7 : vector<2x384xf32>
    %181 = arith.truncf %176 : vector<2x128xf32> to vector<2x128xbf16>
    %cst_48 = arith.constant dense<0.000000e+00> : vector<2x384xf32>
    %182 = tpu.matmul %181, %4, %cst_48 {dimension_numbers = #tpu.dot_dimension_numbers<[1], [0], [0], [1], [0, 0, 1, 1], [], []>} : vector<2x128xbf16>, vector<128x384xbf16>, vector<2x384xf32> -> vector<2x384xf32>
    %183 = vector.extract_strided_slice %180 {offsets = [0, 0], sizes = [2, 128], strides = [1, 1]} : vector<2x384xf32> to vector<2x128xf32>
    %184 = vector.extract_strided_slice %182 {offsets = [0, 0], sizes = [2, 128], strides = [1, 1]} : vector<2x384xf32> to vector<2x128xf32>
    %185 = arith.addf %183, %184 : vector<2x128xf32>
    %186 = arith.negf %185 : vector<2x128xf32>
    %187 = math.exp %186 : vector<2x128xf32>
    %cst_49 = arith.constant 1.000000e+00 : f32
    %188 = vector.broadcast %cst_49 : f32 to vector<2x128xf32>
    %189 = arith.addf %188, %187 : vector<2x128xf32>
    %190 = arith.divf %188, %189 : vector<2x128xf32>
    %191 = vector.extract_strided_slice %180 {offsets = [0, 128], sizes = [2, 128], strides = [1, 1]} : vector<2x384xf32> to vector<2x128xf32>
    %192 = vector.extract_strided_slice %182 {offsets = [0, 128], sizes = [2, 128], strides = [1, 1]} : vector<2x384xf32> to vector<2x128xf32>
    %193 = arith.addf %191, %192 : vector<2x128xf32>
    %194 = arith.negf %193 : vector<2x128xf32>
    %195 = math.exp %194 : vector<2x128xf32>
    %cst_50 = arith.constant 1.000000e+00 : f32
    %196 = vector.broadcast %cst_50 : f32 to vector<2x128xf32>
    %197 = arith.addf %196, %195 : vector<2x128xf32>
    %198 = arith.divf %196, %197 : vector<2x128xf32>
    %199 = vector.extract_strided_slice %180 {offsets = [0, 256], sizes = [2, 128], strides = [1, 1]} : vector<2x384xf32> to vector<2x128xf32>
    %200 = vector.extract_strided_slice %182 {offsets = [0, 256], sizes = [2, 128], strides = [1, 1]} : vector<2x384xf32> to vector<2x128xf32>
    %201 = arith.addf %200, %10 : vector<2x128xf32>
    %202 = arith.mulf %190, %201 : vector<2x128xf32>
    %203 = arith.addf %199, %202 : vector<2x128xf32>
    %204 = math.tanh %203 : vector<2x128xf32>
    %cst_51 = arith.constant 1.000000e+00 : f32
    %205 = vector.broadcast %cst_51 : f32 to vector<2x128xf32>
    %206 = arith.subf %205, %198 : vector<2x128xf32>
    %207 = arith.mulf %206, %204 : vector<2x128xf32>
    %208 = arith.mulf %198, %176 : vector<2x128xf32>
    %209 = arith.addf %207, %208 : vector<2x128xf32>
    %c0_52 = arith.constant 0 : index
    %c6 = arith.constant 6 : index
    %c0_53 = arith.constant 0 : index
    %210 = vector.load %arg2[%c0_52, %c6, %c0_53] : memref<2x8x16xbf16, #tpu.memory_space<vmem>>, vector<2x1x16xbf16>
    %211 = vector.shape_cast %210 : vector<2x1x16xbf16> to vector<2x16xbf16>
    %cst_54 = arith.constant dense<0.000000e+00> : vector<2x384xf32>
    %212 = tpu.matmul %211, %3, %cst_54 {dimension_numbers = #tpu.dot_dimension_numbers<[1], [0], [0], [1], [0, 0, 1, 1], [], []>} : vector<2x16xbf16>, vector<16x384xbf16>, vector<2x384xf32> -> vector<2x384xf32>
    %213 = arith.addf %212, %7 : vector<2x384xf32>
    %214 = arith.truncf %209 : vector<2x128xf32> to vector<2x128xbf16>
    %cst_55 = arith.constant dense<0.000000e+00> : vector<2x384xf32>
    %215 = tpu.matmul %214, %4, %cst_55 {dimension_numbers = #tpu.dot_dimension_numbers<[1], [0], [0], [1], [0, 0, 1, 1], [], []>} : vector<2x128xbf16>, vector<128x384xbf16>, vector<2x384xf32> -> vector<2x384xf32>
    %216 = vector.extract_strided_slice %213 {offsets = [0, 0], sizes = [2, 128], strides = [1, 1]} : vector<2x384xf32> to vector<2x128xf32>
    %217 = vector.extract_strided_slice %215 {offsets = [0, 0], sizes = [2, 128], strides = [1, 1]} : vector<2x384xf32> to vector<2x128xf32>
    %218 = arith.addf %216, %217 : vector<2x128xf32>
    %219 = arith.negf %218 : vector<2x128xf32>
    %220 = math.exp %219 : vector<2x128xf32>
    %cst_56 = arith.constant 1.000000e+00 : f32
    %221 = vector.broadcast %cst_56 : f32 to vector<2x128xf32>
    %222 = arith.addf %221, %220 : vector<2x128xf32>
    %223 = arith.divf %221, %222 : vector<2x128xf32>
    %224 = vector.extract_strided_slice %213 {offsets = [0, 128], sizes = [2, 128], strides = [1, 1]} : vector<2x384xf32> to vector<2x128xf32>
    %225 = vector.extract_strided_slice %215 {offsets = [0, 128], sizes = [2, 128], strides = [1, 1]} : vector<2x384xf32> to vector<2x128xf32>
    %226 = arith.addf %224, %225 : vector<2x128xf32>
    %227 = arith.negf %226 : vector<2x128xf32>
    %228 = math.exp %227 : vector<2x128xf32>
    %cst_57 = arith.constant 1.000000e+00 : f32
    %229 = vector.broadcast %cst_57 : f32 to vector<2x128xf32>
    %230 = arith.addf %229, %228 : vector<2x128xf32>
    %231 = arith.divf %229, %230 : vector<2x128xf32>
    %232 = vector.extract_strided_slice %213 {offsets = [0, 256], sizes = [2, 128], strides = [1, 1]} : vector<2x384xf32> to vector<2x128xf32>
    %233 = vector.extract_strided_slice %215 {offsets = [0, 256], sizes = [2, 128], strides = [1, 1]} : vector<2x384xf32> to vector<2x128xf32>
    %234 = arith.addf %233, %10 : vector<2x128xf32>
    %235 = arith.mulf %223, %234 : vector<2x128xf32>
    %236 = arith.addf %232, %235 : vector<2x128xf32>
    %237 = math.tanh %236 : vector<2x128xf32>
    %cst_58 = arith.constant 1.000000e+00 : f32
    %238 = vector.broadcast %cst_58 : f32 to vector<2x128xf32>
    %239 = arith.subf %238, %231 : vector<2x128xf32>
    %240 = arith.mulf %239, %237 : vector<2x128xf32>
    %241 = arith.mulf %231, %209 : vector<2x128xf32>
    %242 = arith.addf %240, %241 : vector<2x128xf32>
    %c0_59 = arith.constant 0 : index
    %c7 = arith.constant 7 : index
    %c0_60 = arith.constant 0 : index
    %243 = vector.load %arg2[%c0_59, %c7, %c0_60] : memref<2x8x16xbf16, #tpu.memory_space<vmem>>, vector<2x1x16xbf16>
    %244 = vector.shape_cast %243 : vector<2x1x16xbf16> to vector<2x16xbf16>
    %cst_61 = arith.constant dense<0.000000e+00> : vector<2x384xf32>
    %245 = tpu.matmul %244, %3, %cst_61 {dimension_numbers = #tpu.dot_dimension_numbers<[1], [0], [0], [1], [0, 0, 1, 1], [], []>} : vector<2x16xbf16>, vector<16x384xbf16>, vector<2x384xf32> -> vector<2x384xf32>
    %246 = arith.addf %245, %7 : vector<2x384xf32>
    %247 = arith.truncf %242 : vector<2x128xf32> to vector<2x128xbf16>
    %cst_62 = arith.constant dense<0.000000e+00> : vector<2x384xf32>
    %248 = tpu.matmul %247, %4, %cst_62 {dimension_numbers = #tpu.dot_dimension_numbers<[1], [0], [0], [1], [0, 0, 1, 1], [], []>} : vector<2x128xbf16>, vector<128x384xbf16>, vector<2x384xf32> -> vector<2x384xf32>
    %249 = vector.extract_strided_slice %246 {offsets = [0, 0], sizes = [2, 128], strides = [1, 1]} : vector<2x384xf32> to vector<2x128xf32>
    %250 = vector.extract_strided_slice %248 {offsets = [0, 0], sizes = [2, 128], strides = [1, 1]} : vector<2x384xf32> to vector<2x128xf32>
    %251 = arith.addf %249, %250 : vector<2x128xf32>
    %252 = arith.negf %251 : vector<2x128xf32>
    %253 = math.exp %252 : vector<2x128xf32>
    %cst_63 = arith.constant 1.000000e+00 : f32
    %254 = vector.broadcast %cst_63 : f32 to vector<2x128xf32>
    %255 = arith.addf %254, %253 : vector<2x128xf32>
    %256 = arith.divf %254, %255 : vector<2x128xf32>
    %257 = vector.extract_strided_slice %246 {offsets = [0, 128], sizes = [2, 128], strides = [1, 1]} : vector<2x384xf32> to vector<2x128xf32>
    %258 = vector.extract_strided_slice %248 {offsets = [0, 128], sizes = [2, 128], strides = [1, 1]} : vector<2x384xf32> to vector<2x128xf32>
    %259 = arith.addf %257, %258 : vector<2x128xf32>
    %260 = arith.negf %259 : vector<2x128xf32>
    %261 = math.exp %260 : vector<2x128xf32>
    %cst_64 = arith.constant 1.000000e+00 : f32
    %262 = vector.broadcast %cst_64 : f32 to vector<2x128xf32>
    %263 = arith.addf %262, %261 : vector<2x128xf32>
    %264 = arith.divf %262, %263 : vector<2x128xf32>
    %265 = vector.extract_strided_slice %246 {offsets = [0, 256], sizes = [2, 128], strides = [1, 1]} : vector<2x384xf32> to vector<2x128xf32>
    %266 = vector.extract_strided_slice %248 {offsets = [0, 256], sizes = [2, 128], strides = [1, 1]} : vector<2x384xf32> to vector<2x128xf32>
    %267 = arith.addf %266, %10 : vector<2x128xf32>
    %268 = arith.mulf %256, %267 : vector<2x128xf32>
    %269 = arith.addf %265, %268 : vector<2x128xf32>
    %270 = math.tanh %269 : vector<2x128xf32>
    %cst_65 = arith.constant 1.000000e+00 : f32
    %271 = vector.broadcast %cst_65 : f32 to vector<2x128xf32>
    %272 = arith.subf %271, %264 : vector<2x128xf32>
    %273 = arith.mulf %272, %270 : vector<2x128xf32>
    %274 = arith.mulf %264, %242 : vector<2x128xf32>
    %275 = arith.addf %273, %274 : vector<2x128xf32>
    %c0_66 = arith.constant 0 : index
    %c0_67 = arith.constant 0 : index
    %276 = vector.load %arg8[%c0_66, %c0_67] : memref<2x128xf32, #tpu.memory_space<vmem>>, vector<2x128xf32>
    tpu.vector_store %arg8[%c0_66, %c0_67], %275 {strides = array<i32>} : memref<2x128xf32, #tpu.memory_space<vmem>>, vector<2x128xf32>,
    %c0_i32_68 = arith.constant 0 : i32
    %277 = arith.cmpi eq, %arg1, %c0_i32_68 : i32
    %278 = arith.extui %277 : i1 to i32
    %c0_i32_69 = arith.constant 0 : i32
    %279 = arith.cmpi ne, %278, %c0_i32_69 : i32
    scf.if %279 {
      %c0_70 = arith.constant 0 : index
      %c0_71 = arith.constant 0 : index
      %280 = vector.load %arg7[%c0_70, %c0_71] : memref<2x128xf32, #tpu.memory_space<vmem>>, vector<2x128xf32>
      tpu.vector_store %arg7[%c0_70, %c0_71], %275 {strides = array<i32>} : memref<2x128xf32, #tpu.memory_space<vmem>>, vector<2x128xf32>,
    } else {
    }
    return
  }
  func.func @transform_0(%arg0: i32, %arg1: i32) -> (i32, i32, i32) {
    %c0_i32 = arith.constant 0 : i32
    %c0_i32_0 = arith.constant 0 : i32
    return %arg0, %arg1, %c0_i32 : i32, i32, i32
  }
  func.func @transform_1(%arg0: i32, %arg1: i32) -> (i32, i32) {
    %c0_i32 = arith.constant 0 : i32
    %c0_i32_0 = arith.constant 0 : i32
    %c0_i32_1 = arith.constant 0 : i32
    return %c0_i32, %c0_i32_0 : i32, i32
  }
  func.func @transform_2(%arg0: i32, %arg1: i32) -> (i32, i32) {
    %c0_i32 = arith.constant 0 : i32
    %c0_i32_0 = arith.constant 0 : i32
    %c0_i32_1 = arith.constant 0 : i32
    return %c0_i32, %c0_i32_0 : i32, i32
  }
  func.func @transform_3(%arg0: i32, %arg1: i32) -> (i32, i32) {
    %c0_i32 = arith.constant 0 : i32
    %c0_i32_0 = arith.constant 0 : i32
    %c0_i32_1 = arith.constant 0 : i32
    return %c0_i32, %c0_i32_0 : i32, i32
  }
  func.func @transform_4(%arg0: i32, %arg1: i32) -> (i32, i32) {
    %c0_i32 = arith.constant 0 : i32
    %c0_i32_0 = arith.constant 0 : i32
    %c0_i32_1 = arith.constant 0 : i32
    return %c0_i32, %c0_i32_0 : i32, i32
  }
  func.func @transform_5(%arg0: i32, %arg1: i32) -> (i32, i32) {
    %c0_i32 = arith.constant 0 : i32
    %c0_i32_0 = arith.constant 0 : i32
    return %arg0, %c0_i32 : i32, i32
  }
}

</mosaic_0001>

<llo_original>
// kernel: question_embedding_forward.1
$region0: #{question_embedding_forward.1}
  #allocation0 [shape = 'u32[]', space=smem, size = 0x4, offset = 0x4, fixed_abs, tag = 'smem constant byte address 0x4 - core index']
  #allocation1 [shape = 'u32[72,128]{1,0:T(1,128)}', space=vmem, size = 0x9000, scoped, tag = 'internal scratch']
  #allocation2 [shape = 'f32[2,128]{1,0:T(2,128)}', space=vmem, size = 0x400, scoped, tag = 'scratch operand']
  %s0 = inlined_call_operand.vmem [shape: bf16[2,8,16], index: 0, kind: input, shape index: {}]
  %s1 = inlined_call_operand.vmem [shape: bf16[16,384], index: 1, kind: input, shape index: {}]
  %s2 = inlined_call_operand.vmem [shape: f32[1,384], index: 2, kind: input, shape index: {}]
  %s3 = inlined_call_operand.hbm [shape: bf16[128,384], index: 3, kind: input, shape index: {}]
  %s4 = inlined_call_operand.vmem [shape: f32[1,128], index: 4, kind: input, shape index: {}]
  %s5 = inlined_call_operand.hbm [shape: f32[2,128], index: 5, kind: output, shape index: {}]
  %s6 = sld [smem:[#allocation0]]
  $region42: #{question_embedding_forward.1} parent=0
    _
  %s8 = ssub.s32 1, %s6
  %s9 = scalar_select 0, %s8, %s6
  $region1: #{question_embedding_forward.1} parent=0
    #allocation3 [shape = 'u8[98304]{0}', space=vmem, size = 0x18000, scoped, tag = 'input window, operand 3, single buffered']
    #allocation4 [shape = 's32[1]{0}', space=sflag, size = 0x4, scoped, tag = 'scoped memory for question_embedding_forward.1']
    #allocation5 [shape = 's32[1]{0}', space=sflag, size = 0x4, scoped, tag = 'scoped memory for question_embedding_forward.1']
    #allocation6 [shape = 'u8[1024]{0}', space=vmem, size = 0x400, scoped, tag = 'output window, operand 0, single buffered']
    %10 = vsyncpa [#allocation4], 0
    %11 = vsyncpa [#allocation5], 0
    // Predicated region
    $region2: #{question_embedding_forward.1} parent=1 // pred_check
      _
    $region3: #{question_embedding_forward.1} parent=1 // pred_check_branch
      %13 = sbr.rel (0) target = $region5
    $region4: #{question_embedding_forward.1} parent=1 // pred_region
      _
    $region5: #{question_embedding_forward.1} parent=1 // pred_fallthru
      _
    // Predicated region
    $region6: #{question_embedding_forward.1} parent=1 // pred_check
      _
    $region7: #{question_embedding_forward.1} parent=1 // pred_check_branch
      %15 = sbr.rel (0) target = $region9
    $region8: #{question_embedding_forward.1} parent=1 // pred_region
      _
    $region9: #{question_embedding_forward.1} parent=1 // pred_fallthru
      _
    // Predicated region
    $region10: #{question_embedding_forward.1} parent=1 // pred_check
      _
    $region11: #{question_embedding_forward.1} parent=1 // pred_check_branch
      %17 = sbr.rel (0) target = $region13
    $region12: #{question_embedding_forward.1} parent=1 // pred_region
      _
    $region13: #{question_embedding_forward.1} parent=1 // pred_fallthru
      _
    // Predicated region
    $region14: #{question_embedding_forward.1} parent=1 // pred_check
      _
    $region15: #{question_embedding_forward.1} parent=1 // pred_check_branch
      %19 = sbr.rel (0) target = $region17
    $region16: #{question_embedding_forward.1} parent=1 // pred_region
      %21 = vsyncadd [#allocation4], 0
      %s22 = sshll.u32 %s3, 4
      %s23 = int_to_ptr.hbm [resolvable:$true] %s22
      %s24 = sshll.u32 [#allocation3], 4
      %s25 = int_to_ptr.vmem [resolvable:$true] %s24
      %30 = dma.hbm_to_vmem [thread:$0]  %s23, 3072, %s25, [#allocation4], 192, 192, 12
    $region17: #{question_embedding_forward.1} parent=1 // pred_fallthru
      _
    // Predicated region
    $region18: #{question_embedding_forward.1} parent=1 // pred_check
      _
    $region19: #{question_embedding_forward.1} parent=1 // pred_check_branch
      %32 = sbr.rel (0) target = $region21
    $region20: #{question_embedding_forward.1} parent=1 // pred_region
      _
    $region21: #{question_embedding_forward.1} parent=1 // pred_fallthru
      _
    // Predicated region
    $region22: #{question_embedding_forward.1} parent=1 // pred_check
      _
    $region23: #{question_embedding_forward.1} parent=1 // pred_check_branch
      %34 = sbr.rel (0) target = $region25
    $region24: #{question_embedding_forward.1} parent=1 // pred_region
      %36 = dma.done [#allocation4], 3072
    $region25: #{question_embedding_forward.1} parent=1 // pred_fallthru
      _
    %p38 = scmp.eq.s32.totalorder 0, 0
    // Predicated region
    $region26: #{question_embedding_forward.1} parent=1 // pred_check
      %p39 = pneg %p38
    $region27: #{question_embedding_forward.1} parent=1 // pred_check_branch
      %41 = sbr.rel (%p39) target = $region29
    $region28: #{question_embedding_forward.1} parent=1 // pred_region
      %42 = vst [vmem:[#allocation2] sm:$0x3] 0.0
    $region29: #{question_embedding_forward.1} parent=1 // pred_fallthru
      _
    %v43 = vld [vmem:[%s1] sm:$0xff]
    %v44 = vld [vmem:[%s1 + $0x8] sm:$0xf]
    %v45 = vld [vmem:[%s1 + $0xc] sm:$0xff]
    %v46 = vld [vmem:[%s1 + $0x14] sm:$0xf]
    %v47 = vld [vmem:[#allocation3] sm:$0xff]
    %v48 = vld [vmem:[#allocation3 + $0x8] sm:$0xf]
    %v49 = vld [vmem:[#allocation3 + $0xc] sm:$0xff]
    %v50 = vld [vmem:[#allocation3 + $0x14] sm:$0xf]
    %v51 = vld [vmem:[#allocation3 + $0x18] sm:$0xff]
    %v52 = vld [vmem:[#allocation3 + $0x20] sm:$0xf]
    %v53 = vld [vmem:[#allocation3 + $0x24] sm:$0xff]
    %v54 = vld [vmem:[#allocation3 + $0x2c] sm:$0xf]
    %v55 = vld [vmem:[#allocation3 + $0x30] sm:$0xff]
    %v56 = vld [vmem:[#allocation3 + $0x38] sm:$0xf]
    %v57 = vld [vmem:[#allocation3 + $0x3c] sm:$0xff]
    %v58 = vld [vmem:[#allocation3 + $0x44] sm:$0xf]
    %v59 = vld [vmem:[#allocation3 + $0x48] sm:$0xff]
    %v60 = vld [vmem:[#allocation3 + $0x50] sm:$0xf]
    %v61 = vld [vmem:[#allocation3 + $0x54] sm:$0xff]
    %v62 = vld [vmem:[#allocation3 + $0x5c] sm:$0xf]
    %v63 = vld [vmem:[#allocation3 + $0x60] sm:$0xff]
    %v64 = vld [vmem:[#allocation3 + $0x68] sm:$0xf]
    %v65 = vld [vmem:[#allocation3 + $0x6c] sm:$0xff]
    %v66 = vld [vmem:[#allocation3 + $0x74] sm:$0xf]
    %v67 = vld [vmem:[#allocation3 + $0x78] sm:$0xff]
    %v68 = vld [vmem:[#allocation3 + $0x80] sm:$0xf]
    %v69 = vld [vmem:[#allocation3 + $0x84] sm:$0xff]
    %v70 = vld [vmem:[#allocation3 + $0x8c] sm:$0xf]
    %v71 = vld [vmem:[#allocation3 + $0x90] sm:$0xff]
    %v72 = vld [vmem:[#allocation3 + $0x98] sm:$0xf]
    %v73 = vld [vmem:[#allocation3 + $0x9c] sm:$0xff]
    %v74 = vld [vmem:[#allocation3 + $0xa4] sm:$0xf]
    %v75 = vld [vmem:[#allocation3 + $0xa8] sm:$0xff]
    %v76 = vld [vmem:[#allocation3 + $0xb0] sm:$0xf]
    %v77 = vld [vmem:[#allocation3 + $0xb4] sm:$0xff]
    %v78 = vld [vmem:[#allocation3 + $0xbc] sm:$0xf]
    %v79 = vld [vmem:[%s2] sm:$0x7]
    %v81 = vperm.slane %v79, 0
    %v82 = vperm.slane %v79, 1
    %v83 = vperm.slane %v79, 2
    %v87 = vld [vmem:[%s4] sm:$0x1]
    %v89 = vperm.slane %v87, 0
    %v91 = vld [vmem:[#allocation2] sm:$0x3]
    %v92 = vld [vmem:[%s0] sm:$0x1]
    %v93 = vld [vmem:[%s0 + $0x4] sm:$0x1]
    %v96 = vunpack.c.l.b16 %v92
    %v97 = vunpack.c.l.b16 %v93
    %v98 = vpack.c.b16 %v96, %v96
    %v99 = vpack.c.b16 %v97, %v97
    %v100 = vunpack.c.l.b16 %v98
    %v101 = vunpack.c.l.b16 %v99
    %v102 = vrot.slane %v101, 7
    %vm103 = vcmask 1041409
    %v104 = vsel %vm103, %v102, %v100
    %v105 = vpack.c.b16 %v104, %v104
    %v110 = vunpack.c.l.b16 %v43
    %v111 = vunpack.c.h.b16 %v43
    %v112 = vunpack.c.l.b16 %v44
    %v113 = vunpack.c.l.b16 %v45
    %v114 = vunpack.c.h.b16 %v45
    %v115 = vunpack.c.l.b16 %v46
    %v116 = vpack.c.b16 %v113, %v110
    %v117 = vpack.c.b16 %v114, %v111
    %v118 = vpack.c.b16 %v115, %v112
    %vm122 = vcmask 130048
    %v124 = vsel %vm122, %v105, 0
    %126 = vmatpush.bf16.msra.mxu0 0
    %127 = vmatpush.bf16.msra.mxu0 0
    %128 = vmatpush.bf16.msra.mxu0 0
    %129 = vmatpush.bf16.msra.mxu0 0
    %130 = vmatpush.bf16.msra.mxu0 0
    %131 = vmatpush.bf16.msra.mxu0 0
    %132 = vmatpush.bf16.msra.mxu0 0
    %133 = vmatpush.bf16.msra.mxu0 %v116
    %134 = vmatmul.bf16.gmra.mxu0 %v124
    %v135 = vpop.f32.mrf.mxu0
    %v136 = vadd.f32 %v81, %v135
    %v137 = vpop.f32.mrf.mxu0
    %138 = vdwg.mxu0
    %139 = vmatpush.bf16.msra.mxu0 0
    %140 = vmatpush.bf16.msra.mxu0 0
    %141 = vmatpush.bf16.msra.mxu0 0
    %142 = vmatpush.bf16.msra.mxu0 0
    %143 = vmatpush.bf16.msra.mxu0 0
    %144 = vmatpush.bf16.msra.mxu0 0
    %145 = vmatpush.bf16.msra.mxu0 0
    %146 = vmatpush.bf16.msra.mxu0 %v117
    %147 = vmatmul.bf16.gmra.mxu0 %v124
    %v148 = vpop.f32.mrf.mxu0
    %v149 = vadd.f32 %v82, %v148
    %v150 = vpop.f32.mrf.mxu0
    %151 = vdwg.mxu0
    %152 = vmatpush.bf16.msra.mxu0 0
    %153 = vmatpush.bf16.msra.mxu0 0
    %154 = vmatpush.bf16.msra.mxu0 0
    %155 = vmatpush.bf16.msra.mxu0 0
    %156 = vmatpush.bf16.msra.mxu0 0
    %157 = vmatpush.bf16.msra.mxu0 0
    %158 = vmatpush.bf16.msra.mxu0 0
    %159 = vmatpush.bf16.msra.mxu0 %v118
    %160 = vmatmul.bf16.gmra.mxu0 %v124
    %v161 = vpop.f32.mrf.mxu0
    %v162 = vadd.f32 %v83, %v161
    %v163 = vpop.f32.mrf.mxu0
    %164 = vdwg.mxu0
    %v165 = vpack.c.bf16 %v91, %v91
    %v198 = vunpack.c.l.b16 %v47
    %v199 = vunpack.c.h.b16 %v47
    %v200 = vunpack.c.l.b16 %v48
    %v201 = vunpack.c.l.b16 %v49
    %v202 = vunpack.c.h.b16 %v49
    %v203 = vunpack.c.l.b16 %v50
    %v204 = vunpack.c.l.b16 %v51
    %v205 = vunpack.c.h.b16 %v51
    %v206 = vunpack.c.l.b16 %v52
    %v207 = vunpack.c.l.b16 %v53
    %v208 = vunpack.c.h.b16 %v53
    %v209 = vunpack.c.l.b16 %v54
    %v210 = vunpack.c.l.b16 %v55
    %v211 = vunpack.c.h.b16 %v55
    %v212 = vunpack.c.l.b16 %v56
    %v213 = vunpack.c.l.b16 %v57
    %v214 = vunpack.c.h.b16 %v57
    %v215 = vunpack.c.l.b16 %v58
    %v216 = vunpack.c.l.b16 %v59
    %v217 = vunpack.c.h.b16 %v59
    %v218 = vunpack.c.l.b16 %v60
    %v219 = vunpack.c.l.b16 %v61
    %v220 = vunpack.c.h.b16 %v61
    %v221 = vunpack.c.l.b16 %v62
    %v222 = vunpack.c.l.b16 %v63
    %v223 = vunpack.c.h.b16 %v63
    %v224 = vunpack.c.l.b16 %v64
    %v225 = vunpack.c.l.b16 %v65
    %v226 = vunpack.c.h.b16 %v65
    %v227 = vunpack.c.l.b16 %v66
    %v228 = vunpack.c.l.b16 %v67
    %v229 = vunpack.c.h.b16 %v67
    %v230 = vunpack.c.l.b16 %v68
    %v231 = vunpack.c.l.b16 %v69
    %v232 = vunpack.c.h.b16 %v69
    %v233 = vunpack.c.l.b16 %v70
    %v234 = vunpack.c.l.b16 %v71
    %v235 = vunpack.c.h.b16 %v71
    %v236 = vunpack.c.l.b16 %v72
    %v237 = vunpack.c.l.b16 %v73
    %v238 = vunpack.c.h.b16 %v73
    %v239 = vunpack.c.l.b16 %v74
    %v240 = vunpack.c.l.b16 %v75
    %v241 = vunpack.c.h.b16 %v75
    %v242 = vunpack.c.l.b16 %v76
    %v243 = vunpack.c.l.b16 %v77
    %v244 = vunpack.c.h.b16 %v77
    %v245 = vunpack.c.l.b16 %v78
    %v246 = vpack.c.b16 %v201, %v198
    %v247 = vpack.c.b16 %v202, %v199
    %v248 = vpack.c.b16 %v203, %v200
    %v249 = vpack.c.b16 %v207, %v204
    %v250 = vpack.c.b16 %v208, %v205
    %v251 = vpack.c.b16 %v209, %v206
    %v252 = vpack.c.b16 %v213, %v210
    %v253 = vpack.c.b16 %v214, %v211
    %v254 = vpack.c.b16 %v215, %v212
    %v255 = vpack.c.b16 %v219, %v216
    %v256 = vpack.c.b16 %v220, %v217
    %v257 = vpack.c.b16 %v221, %v218
    %v258 = vpack.c.b16 %v225, %v222
    %v259 = vpack.c.b16 %v226, %v223
    %v260 = vpack.c.b16 %v227, %v224
    %v261 = vpack.c.b16 %v231, %v228
    %v262 = vpack.c.b16 %v232, %v229
    %v263 = vpack.c.b16 %v233, %v230
    %v264 = vpack.c.b16 %v237, %v234
    %v265 = vpack.c.b16 %v238, %v235
    %v266 = vpack.c.b16 %v239, %v236
    %v267 = vpack.c.b16 %v243, %v240
    %v268 = vpack.c.b16 %v244, %v241
    %v269 = vpack.c.b16 %v245, %v242
    %294 = vmatpush.bf16.msra.mxu0 %v267
    %295 = vmatpush.bf16.msra.mxu0 %v264
    %296 = vmatpush.bf16.msra.mxu0 %v261
    %297 = vmatpush.bf16.msra.mxu0 %v258
    %298 = vmatpush.bf16.msra.mxu0 %v255
    %299 = vmatpush.bf16.msra.mxu0 %v252
    %300 = vmatpush.bf16.msra.mxu0 %v249
    %301 = vmatpush.bf16.msra.mxu0 %v246
    %302 = vmatmul.bf16.gmra.mxu0 %v165
    %v303 = vpop.f32.mrf.mxu0
    %v304 = vadd.f32 0.0, %v303
    %v305 = vpop.f32.mrf.mxu0
    %306 = vdwg.mxu0
    %307 = vmatpush.bf16.msra.mxu0 %v268
    %308 = vmatpush.bf16.msra.mxu0 %v265
    %309 = vmatpush.bf16.msra.mxu0 %v262
    %310 = vmatpush.bf16.msra.mxu0 %v259
    %311 = vmatpush.bf16.msra.mxu0 %v256
    %312 = vmatpush.bf16.msra.mxu0 %v253
    %313 = vmatpush.bf16.msra.mxu0 %v250
    %314 = vmatpush.bf16.msra.mxu0 %v247
    %315 = vmatmul.bf16.gmra.mxu0 %v165
    %v316 = vpop.f32.mrf.mxu0
    %v317 = vadd.f32 0.0, %v316
    %v318 = vpop.f32.mrf.mxu0
    %319 = vdwg.mxu0
    %320 = vmatpush.bf16.msra.mxu0 %v269
    %321 = vmatpush.bf16.msra.mxu0 %v266
    %322 = vmatpush.bf16.msra.mxu0 %v263
    %323 = vmatpush.bf16.msra.mxu0 %v260
    %324 = vmatpush.bf16.msra.mxu0 %v257
    %325 = vmatpush.bf16.msra.mxu0 %v254
    %326 = vmatpush.bf16.msra.mxu0 %v251
    %327 = vmatpush.bf16.msra.mxu0 %v248
    %328 = vmatmul.bf16.gmra.mxu0 %v165
    %v329 = vpop.f32.mrf.mxu0
    %v330 = vadd.f32 0.0, %v329
    %v331 = vpop.f32.mrf.mxu0
    %332 = vdwg.mxu0
    %v333 = vadd.f32 %v136, %v304
    %v334 = vxor.u32 %v333, 2147483648
    %v335 = vmul.f32 %v334, 1.442695
    %v336 = vpow.pop %v335
    %v337 = vadd.f32 %v336, 1.0
    %v338 = vrcp.pop %v337
    %v339 = vmul.f32 %v337, %v338
    %v340 = vsub.f32 1.0, %v339
    %v341 = vmul.f32 %v338, %v340
    %v342 = vadd.f32 %v338, %v341
    %vm343 = vweird.f32 %v337
    %vm344 = vweird.f32 %v338
    %vm345 = vmor %vm343, %vm344
    %v346 = vsel %vm345, %v338, %v342
    %v347 = vand.u32 2147483647, %v337
    %vm348 = vcmp.eq.f32.partialorder %v347, 8.507059e+37
    %v349 = vand.u32 %v337, 2147483648
    %v350 = vor.u32 1.1754944e-38, %v349
    %v351 = vsel %vm348, %v350, %v346
    %v352 = vmul.f32 1.0, %v351
    %v353 = vadd.f32 %v149, %v317
    %v354 = vxor.u32 %v353, 2147483648
    %v355 = vmul.f32 %v354, 1.442695
    %v356 = vpow.pop %v355
    %v357 = vadd.f32 %v356, 1.0
    %v358 = vrcp.pop %v357
    %v359 = vmul.f32 %v357, %v358
    %v360 = vsub.f32 1.0, %v359
    %v361 = vmul.f32 %v358, %v360
    %v362 = vadd.f32 %v358, %v361
    %vm363 = vweird.f32 %v357
    %vm364 = vweird.f32 %v358
    %vm365 = vmor %vm363, %vm364
    %v366 = vsel %vm365, %v358, %v362
    %v367 = vand.u32 2147483647, %v357
    %vm368 = vcmp.eq.f32.partialorder %v367, 8.507059e+37
    %v369 = vand.u32 %v357, 2147483648
    %v370 = vor.u32 1.1754944e-38, %v369
    %v371 = vsel %vm368, %v370, %v366
    %v372 = vmul.f32 1.0, %v371
    %v373 = vadd.f32 %v330, %v89
    %v374 = vmul.f32 %v352, %v373
    %v375 = vadd.f32 %v162, %v374
    %v376 = vtanh.pop %v375
    %v377 = vsub.f32 1.0, %v372
    %v378 = vmul.f32 %v377, %v376
    %v379 = vmul.f32 %v372, %v91
    %v380 = vadd.f32 %v378, %v379
    %v381 = vrot.slane %v100, 1
    %v382 = vsel %vm103, %v101, %v381
    %v383 = vpack.c.b16 %v382, %v382
    %v385 = vsel %vm122, %v383, 0
    %387 = vmatpush.bf16.msra.mxu0 0
    %388 = vmatpush.bf16.msra.mxu0 0
    %389 = vmatpush.bf16.msra.mxu0 0
    %390 = vmatpush.bf16.msra.mxu0 0
    %391 = vmatpush.bf16.msra.mxu0 0
    %392 = vmatpush.bf16.msra.mxu0 0
    %393 = vmatpush.bf16.msra.mxu0 0
    %394 = vmatpush.bf16.msra.mxu0 %v116
    %395 = vmatmul.bf16.gmra.mxu0 %v385
    %v396 = vpop.f32.mrf.mxu0
    %v397 = vadd.f32 %v81, %v396
    %v398 = vpop.f32.mrf.mxu0
    %399 = vdwg.mxu0
    %400 = vmatpush.bf16.msra.mxu0 0
    %401 = vmatpush.bf16.msra.mxu0 0
    %402 = vmatpush.bf16.msra.mxu0 0
    %403 = vmatpush.bf16.msra.mxu0 0
    %404 = vmatpush.bf16.msra.mxu0 0
    %405 = vmatpush.bf16.msra.mxu0 0
    %406 = vmatpush.bf16.msra.mxu0 0
    %407 = vmatpush.bf16.msra.mxu0 %v117
    %408 = vmatmul.bf16.gmra.mxu0 %v385
    %v409 = vpop.f32.mrf.mxu0
    %v410 = vadd.f32 %v82, %v409
    %v411 = vpop.f32.mrf.mxu0
    %412 = vdwg.mxu0
    %413 = vmatpush.bf16.msra.mxu0 0
    %414 = vmatpush.bf16.msra.mxu0 0
    %415 = vmatpush.bf16.msra.mxu0 0
    %416 = vmatpush.bf16.msra.mxu0 0
    %417 = vmatpush.bf16.msra.mxu0 0
    %418 = vmatpush.bf16.msra.mxu0 0
    %419 = vmatpush.bf16.msra.mxu0 0
    %420 = vmatpush.bf16.msra.mxu0 %v118
    %421 = vmatmul.bf16.gmra.mxu0 %v385
    %v422 = vpop.f32.mrf.mxu0
    %v423 = vadd.f32 %v83, %v422
    %v424 = vpop.f32.mrf.mxu0
    %425 = vdwg.mxu0
    %v426 = vpack.c.bf16 %v380, %v380
    %427 = vmatpush.bf16.msra.mxu0 %v267
    %428 = vmatpush.bf16.msra.mxu0 %v264
    %429 = vmatpush.bf16.msra.mxu0 %v261
    %430 = vmatpush.bf16.msra.mxu0 %v258
    %431 = vmatpush.bf16.msra.mxu0 %v255
    %432 = vmatpush.bf16.msra.mxu0 %v252
    %433 = vmatpush.bf16.msra.mxu0 %v249
    %434 = vmatpush.bf16.msra.mxu0 %v246
    %435 = vmatmul.bf16.gmra.mxu0 %v426
    %v436 = vpop.f32.mrf.mxu0
    %v437 = vadd.f32 0.0, %v436
    %v438 = vpop.f32.mrf.mxu0
    %439 = vdwg.mxu0
    %440 = vmatpush.bf16.msra.mxu0 %v268
    %441 = vmatpush.bf16.msra.mxu0 %v265
    %442 = vmatpush.bf16.msra.mxu0 %v262
    %443 = vmatpush.bf16.msra.mxu0 %v259
    %444 = vmatpush.bf16.msra.mxu0 %v256
    %445 = vmatpush.bf16.msra.mxu0 %v253
    %446 = vmatpush.bf16.msra.mxu0 %v250
    %447 = vmatpush.bf16.msra.mxu0 %v247
    %448 = vmatmul.bf16.gmra.mxu0 %v426
    %v449 = vpop.f32.mrf.mxu0
    %v450 = vadd.f32 0.0, %v449
    %v451 = vpop.f32.mrf.mxu0
    %452 = vdwg.mxu0
    %453 = vmatpush.bf16.msra.mxu0 %v269
    %454 = vmatpush.bf16.msra.mxu0 %v266
    %455 = vmatpush.bf16.msra.mxu0 %v263
    %456 = vmatpush.bf16.msra.mxu0 %v260
    %457 = vmatpush.bf16.msra.mxu0 %v257
    %458 = vmatpush.bf16.msra.mxu0 %v254
    %459 = vmatpush.bf16.msra.mxu0 %v251
    %460 = vmatpush.bf16.msra.mxu0 %v248
    %461 = vmatmul.bf16.gmra.mxu0 %v426
    %v462 = vpop.f32.mrf.mxu0
    %v463 = vadd.f32 0.0, %v462
    %v464 = vpop.f32.mrf.mxu0
    %465 = vdwg.mxu0
    %v466 = vadd.f32 %v397, %v437
    %v467 = vxor.u32 %v466, 2147483648
    %v468 = vmul.f32 %v467, 1.442695
    %v469 = vpow.pop %v468
    %v470 = vadd.f32 %v469, 1.0
    %v471 = vrcp.pop %v470
    %v472 = vmul.f32 %v470, %v471
    %v473 = vsub.f32 1.0, %v472
    %v474 = vmul.f32 %v471, %v473
    %v475 = vadd.f32 %v471, %v474
    %vm476 = vweird.f32 %v470
    %vm477 = vweird.f32 %v471
    %vm478 = vmor %vm476, %vm477
    %v479 = vsel %vm478, %v471, %v475
    %v480 = vand.u32 2147483647, %v470
    %vm481 = vcmp.eq.f32.partialorder %v480, 8.507059e+37
    %v482 = vand.u32 %v470, 2147483648
    %v483 = vor.u32 1.1754944e-38, %v482
    %v484 = vsel %vm481, %v483, %v479
    %v485 = vmul.f32 1.0, %v484
    %v486 = vadd.f32 %v410, %v450
    %v487 = vxor.u32 %v486, 2147483648
    %v488 = vmul.f32 %v487, 1.442695
    %v489 = vpow.pop %v488
    %v490 = vadd.f32 %v489, 1.0
    %v491 = vrcp.pop %v490
    %v492 = vmul.f32 %v490, %v491
    %v493 = vsub.f32 1.0, %v492
    %v494 = vmul.f32 %v491, %v493
    %v495 = vadd.f32 %v491, %v494
    %vm496 = vweird.f32 %v490
    %vm497 = vweird.f32 %v491
    %vm498 = vmor %vm496, %vm497
    %v499 = vsel %vm498, %v491, %v495
    %v500 = vand.u32 2147483647, %v490
    %vm501 = vcmp.eq.f32.partialorder %v500, 8.507059e+37
    %v502 = vand.u32 %v490, 2147483648
    %v503 = vor.u32 1.1754944e-38, %v502
    %v504 = vsel %vm501, %v503, %v499
    %v505 = vmul.f32 1.0, %v504
    %v506 = vadd.f32 %v463, %v89
    %v507 = vmul.f32 %v485, %v506
    %v508 = vadd.f32 %v423, %v507
    %v509 = vtanh.pop %v508
    %v510 = vsub.f32 1.0, %v505
    %v511 = vmul.f32 %v510, %v509
    %v512 = vmul.f32 %v505, %v380
    %v513 = vadd.f32 %v511, %v512
    %v514 = vld [vmem:[%s0] sm:$0x2]
    %v515 = vld [vmem:[%s0 + $0x4] sm:$0x2]
    %v518 = vunpack.c.l.b16 %v514
    %v519 = vunpack.c.l.b16 %v515
    %v520 = vpack.c.b16 %v518, %v518
    %v521 = vpack.c.b16 %v519, %v519
    %v522 = vunpack.c.l.b16 %v520
    %v523 = vunpack.c.l.b16 %v521
    %v524 = vrot.slane %v522, 2
    %v525 = vrot.slane %v523, 1
    %v526 = vsel %vm103, %v525, %v524
    %v527 = vpack.c.b16 %v526, %v526
    %v529 = vsel %vm122, %v527, 0
    %531 = vmatpush.bf16.msra.mxu0 0
    %532 = vmatpush.bf16.msra.mxu0 0
    %533 = vmatpush.bf16.msra.mxu0 0
    %534 = vmatpush.bf16.msra.mxu0 0
    %535 = vmatpush.bf16.msra.mxu0 0
    %536 = vmatpush.bf16.msra.mxu0 0
    %537 = vmatpush.bf16.msra.mxu0 0
    %538 = vmatpush.bf16.msra.mxu0 %v116
    %539 = vmatmul.bf16.gmra.mxu0 %v529
    %v540 = vpop.f32.mrf.mxu0
    %v541 = vadd.f32 %v81, %v540
    %v542 = vpop.f32.mrf.mxu0
    %543 = vdwg.mxu0
    %544 = vmatpush.bf16.msra.mxu0 0
    %545 = vmatpush.bf16.msra.mxu0 0
    %546 = vmatpush.bf16.msra.mxu0 0
    %547 = vmatpush.bf16.msra.mxu0 0
    %548 = vmatpush.bf16.msra.mxu0 0
    %549 = vmatpush.bf16.msra.mxu0 0
    %550 = vmatpush.bf16.msra.mxu0 0
    %551 = vmatpush.bf16.msra.mxu0 %v117
    %552 = vmatmul.bf16.gmra.mxu0 %v529
    %v553 = vpop.f32.mrf.mxu0
    %v554 = vadd.f32 %v82, %v553
    %v555 = vpop.f32.mrf.mxu0
    %556 = vdwg.mxu0
    %557 = vmatpush.bf16.msra.mxu0 0
    %558 = vmatpush.bf16.msra.mxu0 0
    %559 = vmatpush.bf16.msra.mxu0 0
    %560 = vmatpush.bf16.msra.mxu0 0
    %561 = vmatpush.bf16.msra.mxu0 0
    %562 = vmatpush.bf16.msra.mxu0 0
    %563 = vmatpush.bf16.msra.mxu0 0
    %564 = vmatpush.bf16.msra.mxu0 %v118
    %565 = vmatmul.bf16.gmra.mxu0 %v529
    %v566 = vpop.f32.mrf.mxu0
    %v567 = vadd.f32 %v83, %v566
    %v568 = vpop.f32.mrf.mxu0
    %569 = vdwg.mxu0
    %v570 = vpack.c.bf16 %v513, %v513
    %571 = vmatpush.bf16.msra.mxu0 %v267
    %572 = vmatpush.bf16.msra.mxu0 %v264
    %573 = vmatpush.bf16.msra.mxu0 %v261
    %574 = vmatpush.bf16.msra.mxu0 %v258
    %575 = vmatpush.bf16.msra.mxu0 %v255
    %576 = vmatpush.bf16.msra.mxu0 %v252
    %577 = vmatpush.bf16.msra.mxu0 %v249
    %578 = vmatpush.bf16.msra.mxu0 %v246
    %579 = vmatmul.bf16.gmra.mxu0 %v570
    %v580 = vpop.f32.mrf.mxu0
    %v581 = vadd.f32 0.0, %v580
    %v582 = vpop.f32.mrf.mxu0
    %583 = vdwg.mxu0
    %584 = vmatpush.bf16.msra.mxu0 %v268
    %585 = vmatpush.bf16.msra.mxu0 %v265
    %586 = vmatpush.bf16.msra.mxu0 %v262
    %587 = vmatpush.bf16.msra.mxu0 %v259
    %588 = vmatpush.bf16.msra.mxu0 %v256
    %589 = vmatpush.bf16.msra.mxu0 %v253
    %590 = vmatpush.bf16.msra.mxu0 %v250
    %591 = vmatpush.bf16.msra.mxu0 %v247
    %592 = vmatmul.bf16.gmra.mxu0 %v570
    %v593 = vpop.f32.mrf.mxu0
    %v594 = vadd.f32 0.0, %v593
    %v595 = vpop.f32.mrf.mxu0
    %596 = vdwg.mxu0
    %597 = vmatpush.bf16.msra.mxu0 %v269
    %598 = vmatpush.bf16.msra.mxu0 %v266
    %599 = vmatpush.bf16.msra.mxu0 %v263
    %600 = vmatpush.bf16.msra.mxu0 %v260
    %601 = vmatpush.bf16.msra.mxu0 %v257
    %602 = vmatpush.bf16.msra.mxu0 %v254
    %603 = vmatpush.bf16.msra.mxu0 %v251
    %604 = vmatpush.bf16.msra.mxu0 %v248
    %605 = vmatmul.bf16.gmra.mxu0 %v570
    %v606 = vpop.f32.mrf.mxu0
    %v607 = vadd.f32 0.0, %v606
    %v608 = vpop.f32.mrf.mxu0
    %609 = vdwg.mxu0
    %v610 = vadd.f32 %v541, %v581
    %v611 = vxor.u32 %v610, 2147483648
    %v612 = vmul.f32 %v611, 1.442695
    %v613 = vpow.pop %v612
    %v614 = vadd.f32 %v613, 1.0
    %v615 = vrcp.pop %v614
    %v616 = vmul.f32 %v614, %v615
    %v617 = vsub.f32 1.0, %v616
    %v618 = vmul.f32 %v615, %v617
    %v619 = vadd.f32 %v615, %v618
    %vm620 = vweird.f32 %v614
    %vm621 = vweird.f32 %v615
    %vm622 = vmor %vm620, %vm621
    %v623 = vsel %vm622, %v615, %v619
    %v624 = vand.u32 2147483647, %v614
    %vm625 = vcmp.eq.f32.partialorder %v624, 8.507059e+37
    %v626 = vand.u32 %v614, 2147483648
    %v627 = vor.u32 1.1754944e-38, %v626
    %v628 = vsel %vm625, %v627, %v623
    %v629 = vmul.f32 1.0, %v628
    %v630 = vadd.f32 %v554, %v594
    %v631 = vxor.u32 %v630, 2147483648
    %v632 = vmul.f32 %v631, 1.442695
    %v633 = vpow.pop %v632
    %v634 = vadd.f32 %v633, 1.0
    %v635 = vrcp.pop %v634
    %v636 = vmul.f32 %v634, %v635
    %v637 = vsub.f32 1.0, %v636
    %v638 = vmul.f32 %v635, %v637
    %v639 = vadd.f32 %v635, %v638
    %vm640 = vweird.f32 %v634
    %vm641 = vweird.f32 %v635
    %vm642 = vmor %vm640, %vm641
    %v643 = vsel %vm642, %v635, %v639
    %v644 = vand.u32 2147483647, %v634
    %vm645 = vcmp.eq.f32.partialorder %v644, 8.507059e+37
    %v646 = vand.u32 %v634, 2147483648
    %v647 = vor.u32 1.1754944e-38, %v646
    %v648 = vsel %vm645, %v647, %v643
    %v649 = vmul.f32 1.0, %v648
    %v650 = vadd.f32 %v607, %v89
    %v651 = vmul.f32 %v629, %v650
    %v652 = vadd.f32 %v567, %v651
    %v653 = vtanh.pop %v652
    %v654 = vsub.f32 1.0, %v649
    %v655 = vmul.f32 %v654, %v653
    %v656 = vmul.f32 %v649, %v513
    %v657 = vadd.f32 %v655, %v656
    %v658 = vrot.slane %v522, 3
    %v659 = vrot.slane %v523, 2
    %v660 = vsel %vm103, %v659, %v658
    %v661 = vpack.c.b16 %v660, %v660
    %v663 = vsel %vm122, %v661, 0
    %665 = vmatpush.bf16.msra.mxu0 0
    %666 = vmatpush.bf16.msra.mxu0 0
    %667 = vmatpush.bf16.msra.mxu0 0
    %668 = vmatpush.bf16.msra.mxu0 0
    %669 = vmatpush.bf16.msra.mxu0 0
    %670 = vmatpush.bf16.msra.mxu0 0
    %671 = vmatpush.bf16.msra.mxu0 0
    %672 = vmatpush.bf16.msra.mxu0 %v116
    %673 = vmatmul.bf16.gmra.mxu0 %v663
    %v674 = vpop.f32.mrf.mxu0
    %v675 = vadd.f32 %v81, %v674
    %v676 = vpop.f32.mrf.mxu0
    %677 = vdwg.mxu0
    %678 = vmatpush.bf16.msra.mxu0 0
    %679 = vmatpush.bf16.msra.mxu0 0
    %680 = vmatpush.bf16.msra.mxu0 0
    %681 = vmatpush.bf16.msra.mxu0 0
    %682 = vmatpush.bf16.msra.mxu0 0
    %683 = vmatpush.bf16.msra.mxu0 0
    %684 = vmatpush.bf16.msra.mxu0 0
    %685 = vmatpush.bf16.msra.mxu0 %v117
    %686 = vmatmul.bf16.gmra.mxu0 %v663
    %v687 = vpop.f32.mrf.mxu0
    %v688 = vadd.f32 %v82, %v687
    %v689 = vpop.f32.mrf.mxu0
    %690 = vdwg.mxu0
    %691 = vmatpush.bf16.msra.mxu0 0
    %692 = vmatpush.bf16.msra.mxu0 0
    %693 = vmatpush.bf16.msra.mxu0 0
    %694 = vmatpush.bf16.msra.mxu0 0
    %695 = vmatpush.bf16.msra.mxu0 0
    %696 = vmatpush.bf16.msra.mxu0 0
    %697 = vmatpush.bf16.msra.mxu0 0
    %698 = vmatpush.bf16.msra.mxu0 %v118
    %699 = vmatmul.bf16.gmra.mxu0 %v663
    %v700 = vpop.f32.mrf.mxu0
    %v701 = vadd.f32 %v83, %v700
    %v702 = vpop.f32.mrf.mxu0
    %703 = vdwg.mxu0
    %v704 = vpack.c.bf16 %v657, %v657
    %705 = vmatpush.bf16.msra.mxu0 %v267
    %706 = vmatpush.bf16.msra.mxu0 %v264
    %707 = vmatpush.bf16.msra.mxu0 %v261
    %708 = vmatpush.bf16.msra.mxu0 %v258
    %709 = vmatpush.bf16.msra.mxu0 %v255
    %710 = vmatpush.bf16.msra.mxu0 %v252
    %711 = vmatpush.bf16.msra.mxu0 %v249
    %712 = vmatpush.bf16.msra.mxu0 %v246
    %713 = vmatmul.bf16.gmra.mxu0 %v704
    %v714 = vpop.f32.mrf.mxu0
    %v715 = vadd.f32 0.0, %v714
    %v716 = vpop.f32.mrf.mxu0
    %717 = vdwg.mxu0
    %718 = vmatpush.bf16.msra.mxu0 %v268
    %719 = vmatpush.bf16.msra.mxu0 %v265
    %720 = vmatpush.bf16.msra.mxu0 %v262
    %721 = vmatpush.bf16.msra.mxu0 %v259
    %722 = vmatpush.bf16.msra.mxu0 %v256
    %723 = vmatpush.bf16.msra.mxu0 %v253
    %724 = vmatpush.bf16.msra.mxu0 %v250
    %725 = vmatpush.bf16.msra.mxu0 %v247
    %726 = vmatmul.bf16.gmra.mxu0 %v704
    %v727 = vpop.f32.mrf.mxu0
    %v728 = vadd.f32 0.0, %v727
    %v729 = vpop.f32.mrf.mxu0
    %730 = vdwg.mxu0
    %731 = vmatpush.bf16.msra.mxu0 %v269
    %732 = vmatpush.bf16.msra.mxu0 %v266
    %733 = vmatpush.bf16.msra.mxu0 %v263
    %734 = vmatpush.bf16.msra.mxu0 %v260
    %735 = vmatpush.bf16.msra.mxu0 %v257
    %736 = vmatpush.bf16.msra.mxu0 %v254
    %737 = vmatpush.bf16.msra.mxu0 %v251
    %738 = vmatpush.bf16.msra.mxu0 %v248
    %739 = vmatmul.bf16.gmra.mxu0 %v704
    %v740 = vpop.f32.mrf.mxu0
    %v741 = vadd.f32 0.0, %v740
    %v742 = vpop.f32.mrf.mxu0
    %743 = vdwg.mxu0
    %v744 = vadd.f32 %v675, %v715
    %v745 = vxor.u32 %v744, 2147483648
    %v746 = vmul.f32 %v745, 1.442695
    %v747 = vpow.pop %v746
    %v748 = vadd.f32 %v747, 1.0
    %v749 = vrcp.pop %v748
    %v750 = vmul.f32 %v748, %v749
    %v751 = vsub.f32 1.0, %v750
    %v752 = vmul.f32 %v749, %v751
    %v753 = vadd.f32 %v749, %v752
    %vm754 = vweird.f32 %v748
    %vm755 = vweird.f32 %v749
    %vm756 = vmor %vm754, %vm755
    %v757 = vsel %vm756, %v749, %v753
    %v758 = vand.u32 2147483647, %v748
    %vm759 = vcmp.eq.f32.partialorder %v758, 8.507059e+37
    %v760 = vand.u32 %v748, 2147483648
    %v761 = vor.u32 1.1754944e-38, %v760
    %v762 = vsel %vm759, %v761, %v757
    %v763 = vmul.f32 1.0, %v762
    %v764 = vadd.f32 %v688, %v728
    %v765 = vxor.u32 %v764, 2147483648
    %v766 = vmul.f32 %v765, 1.442695
    %v767 = vpow.pop %v766
    %v768 = vadd.f32 %v767, 1.0
    %v769 = vrcp.pop %v768
    %v770 = vmul.f32 %v768, %v769
    %v771 = vsub.f32 1.0, %v770
    %v772 = vmul.f32 %v769, %v771
    %v773 = vadd.f32 %v769, %v772
    %vm774 = vweird.f32 %v768
    %vm775 = vweird.f32 %v769
    %vm776 = vmor %vm774, %vm775
    %v777 = vsel %vm776, %v769, %v773
    %v778 = vand.u32 2147483647, %v768
    %vm779 = vcmp.eq.f32.partialorder %v778, 8.507059e+37
    %v780 = vand.u32 %v768, 2147483648
    %v781 = vor.u32 1.1754944e-38, %v780
    %v782 = vsel %vm779, %v781, %v777
    %v783 = vmul.f32 1.0, %v782
    %v784 = vadd.f32 %v741, %v89
    %v785 = vmul.f32 %v763, %v784
    %v786 = vadd.f32 %v701, %v785
    %v787 = vtanh.pop %v786
    %v788 = vsub.f32 1.0, %v783
    %v789 = vmul.f32 %v788, %v787
    %v790 = vmul.f32 %v783, %v657
    %v791 = vadd.f32 %v789, %v790
    %v792 = vld [vmem:[%s0] sm:$0x4]
    %v793 = vld [vmem:[%s0 + $0x4] sm:$0x4]
    %v796 = vunpack.c.l.b16 %v792
    %v797 = vunpack.c.l.b16 %v793
    %v798 = vpack.c.b16 %v796, %v796
    %v799 = vpack.c.b16 %v797, %v797
    %v800 = vunpack.c.l.b16 %v798
    %v801 = vunpack.c.l.b16 %v799
    %v802 = vrot.slane %v800, 4
    %v803 = vrot.slane %v801, 3
    %v804 = vsel %vm103, %v803, %v802
    %v805 = vpack.c.b16 %v804, %v804
    %v807 = vsel %vm122, %v805, 0
    %809 = vmatpush.bf16.msra.mxu0 0
    %810 = vmatpush.bf16.msra.mxu0 0
    %811 = vmatpush.bf16.msra.mxu0 0
    %812 = vmatpush.bf16.msra.mxu0 0
    %813 = vmatpush.bf16.msra.mxu0 0
    %814 = vmatpush.bf16.msra.mxu0 0
    %815 = vmatpush.bf16.msra.mxu0 0
    %816 = vmatpush.bf16.msra.mxu0 %v116
    %817 = vmatmul.bf16.gmra.mxu0 %v807
    %v818 = vpop.f32.mrf.mxu0
    %v819 = vadd.f32 %v81, %v818
    %v820 = vpop.f32.mrf.mxu0
    %821 = vdwg.mxu0
    %822 = vmatpush.bf16.msra.mxu0 0
    %823 = vmatpush.bf16.msra.mxu0 0
    %824 = vmatpush.bf16.msra.mxu0 0
    %825 = vmatpush.bf16.msra.mxu0 0
    %826 = vmatpush.bf16.msra.mxu0 0
    %827 = vmatpush.bf16.msra.mxu0 0
    %828 = vmatpush.bf16.msra.mxu0 0
    %829 = vmatpush.bf16.msra.mxu0 %v117
    %830 = vmatmul.bf16.gmra.mxu0 %v807
    %v831 = vpop.f32.mrf.mxu0
    %v832 = vadd.f32 %v82, %v831
    %v833 = vpop.f32.mrf.mxu0
    %834 = vdwg.mxu0
    %835 = vmatpush.bf16.msra.mxu0 0
    %836 = vmatpush.bf16.msra.mxu0 0
    %837 = vmatpush.bf16.msra.mxu0 0
    %838 = vmatpush.bf16.msra.mxu0 0
    %839 = vmatpush.bf16.msra.mxu0 0
    %840 = vmatpush.bf16.msra.mxu0 0
    %841 = vmatpush.bf16.msra.mxu0 0
    %842 = vmatpush.bf16.msra.mxu0 %v118
    %843 = vmatmul.bf16.gmra.mxu0 %v807
    %v844 = vpop.f32.mrf.mxu0
    %v845 = vadd.f32 %v83, %v844
    %v846 = vpop.f32.mrf.mxu0
    %847 = vdwg.mxu0
    %v848 = vpack.c.bf16 %v791, %v791
    %849 = vmatpush.bf16.msra.mxu0 %v267
    %850 = vmatpush.bf16.msra.mxu0 %v264
    %851 = vmatpush.bf16.msra.mxu0 %v261
    %852 = vmatpush.bf16.msra.mxu0 %v258
    %853 = vmatpush.bf16.msra.mxu0 %v255
    %854 = vmatpush.bf16.msra.mxu0 %v252
    %855 = vmatpush.bf16.msra.mxu0 %v249
    %856 = vmatpush.bf16.msra.mxu0 %v246
    %857 = vmatmul.bf16.gmra.mxu0 %v848
    %v858 = vpop.f32.mrf.mxu0
    %v859 = vadd.f32 0.0, %v858
    %v860 = vpop.f32.mrf.mxu0
    %861 = vdwg.mxu0
    %862 = vmatpush.bf16.msra.mxu0 %v268
    %863 = vmatpush.bf16.msra.mxu0 %v265
    %864 = vmatpush.bf16.msra.mxu0 %v262
    %865 = vmatpush.bf16.msra.mxu0 %v259
    %866 = vmatpush.bf16.msra.mxu0 %v256
    %867 = vmatpush.bf16.msra.mxu0 %v253
    %868 = vmatpush.bf16.msra.mxu0 %v250
    %869 = vmatpush.bf16.msra.mxu0 %v247
    %870 = vmatmul.bf16.gmra.mxu0 %v848
    %v871 = vpop.f32.mrf.mxu0
    %v872 = vadd.f32 0.0, %v871
    %v873 = vpop.f32.mrf.mxu0
    %874 = vdwg.mxu0
    %875 = vmatpush.bf16.msra.mxu0 %v269
    %876 = vmatpush.bf16.msra.mxu0 %v266
    %877 = vmatpush.bf16.msra.mxu0 %v263
    %878 = vmatpush.bf16.msra.mxu0 %v260
    %879 = vmatpush.bf16.msra.mxu0 %v257
    %880 = vmatpush.bf16.msra.mxu0 %v254
    %881 = vmatpush.bf16.msra.mxu0 %v251
    %882 = vmatpush.bf16.msra.mxu0 %v248
    %883 = vmatmul.bf16.gmra.mxu0 %v848
    %v884 = vpop.f32.mrf.mxu0
    %v885 = vadd.f32 0.0, %v884
    %v886 = vpop.f32.mrf.mxu0
    %887 = vdwg.mxu0
    %v888 = vadd.f32 %v819, %v859
    %v889 = vxor.u32 %v888, 2147483648
    %v890 = vmul.f32 %v889, 1.442695
    %v891 = vpow.pop %v890
    %v892 = vadd.f32 %v891, 1.0
    %v893 = vrcp.pop %v892
    %v894 = vmul.f32 %v892, %v893
    %v895 = vsub.f32 1.0, %v894
    %v896 = vmul.f32 %v893, %v895
    %v897 = vadd.f32 %v893, %v896
    %vm898 = vweird.f32 %v892
    %vm899 = vweird.f32 %v893
    %vm900 = vmor %vm898, %vm899
    %v901 = vsel %vm900, %v893, %v897
    %v902 = vand.u32 2147483647, %v892
    %vm903 = vcmp.eq.f32.partialorder %v902, 8.507059e+37
    %v904 = vand.u32 %v892, 2147483648
    %v905 = vor.u32 1.1754944e-38, %v904
    %v906 = vsel %vm903, %v905, %v901
    %v907 = vmul.f32 1.0, %v906
    %v908 = vadd.f32 %v832, %v872
    %v909 = vxor.u32 %v908, 2147483648
    %v910 = vmul.f32 %v909, 1.442695
    %v911 = vpow.pop %v910
    %v912 = vadd.f32 %v911, 1.0
    %v913 = vrcp.pop %v912
    %v914 = vmul.f32 %v912, %v913
    %v915 = vsub.f32 1.0, %v914
    %v916 = vmul.f32 %v913, %v915
    %v917 = vadd.f32 %v913, %v916
    %vm918 = vweird.f32 %v912
    %vm919 = vweird.f32 %v913
    %vm920 = vmor %vm918, %vm919
    %v921 = vsel %vm920, %v913, %v917
    %v922 = vand.u32 2147483647, %v912
    %vm923 = vcmp.eq.f32.partialorder %v922, 8.507059e+37
    %v924 = vand.u32 %v912, 2147483648
    %v925 = vor.u32 1.1754944e-38, %v924
    %v926 = vsel %vm923, %v925, %v921
    %v927 = vmul.f32 1.0, %v926
    %v928 = vadd.f32 %v885, %v89
    %v929 = vmul.f32 %v907, %v928
    %v930 = vadd.f32 %v845, %v929
    %v931 = vtanh.pop %v930
    %v932 = vsub.f32 1.0, %v927
    %v933 = vmul.f32 %v932, %v931
    %v934 = vmul.f32 %v927, %v791
    %v935 = vadd.f32 %v933, %v934
    %v936 = vrot.slane %v800, 5
    %v937 = vrot.slane %v801, 4
    %v938 = vsel %vm103, %v937, %v936
    %v939 = vpack.c.b16 %v938, %v938
    %v941 = vsel %vm122, %v939, 0
    %943 = vmatpush.bf16.msra.mxu0 0
    %944 = vmatpush.bf16.msra.mxu0 0
    %945 = vmatpush.bf16.msra.mxu0 0
    %946 = vmatpush.bf16.msra.mxu0 0
    %947 = vmatpush.bf16.msra.mxu0 0
    %948 = vmatpush.bf16.msra.mxu0 0
    %949 = vmatpush.bf16.msra.mxu0 0
    %950 = vmatpush.bf16.msra.mxu0 %v116
    %951 = vmatmul.bf16.gmra.mxu0 %v941
    %v952 = vpop.f32.mrf.mxu0
    %v953 = vadd.f32 %v81, %v952
    %v954 = vpop.f32.mrf.mxu0
    %955 = vdwg.mxu0
    %956 = vmatpush.bf16.msra.mxu0 0
    %957 = vmatpush.bf16.msra.mxu0 0
    %958 = vmatpush.bf16.msra.mxu0 0
    %959 = vmatpush.bf16.msra.mxu0 0
    %960 = vmatpush.bf16.msra.mxu0 0
    %961 = vmatpush.bf16.msra.mxu0 0
    %962 = vmatpush.bf16.msra.mxu0 0
    %963 = vmatpush.bf16.msra.mxu0 %v117
    %964 = vmatmul.bf16.gmra.mxu0 %v941
    %v965 = vpop.f32.mrf.mxu0
    %v966 = vadd.f32 %v82, %v965
    %v967 = vpop.f32.mrf.mxu0
    %968 = vdwg.mxu0
    %969 = vmatpush.bf16.msra.mxu0 0
    %970 = vmatpush.bf16.msra.mxu0 0
    %971 = vmatpush.bf16.msra.mxu0 0
    %972 = vmatpush.bf16.msra.mxu0 0
    %973 = vmatpush.bf16.msra.mxu0 0
    %974 = vmatpush.bf16.msra.mxu0 0
    %975 = vmatpush.bf16.msra.mxu0 0
    %976 = vmatpush.bf16.msra.mxu0 %v118
    %977 = vmatmul.bf16.gmra.mxu0 %v941
    %v978 = vpop.f32.mrf.mxu0
    %v979 = vadd.f32 %v83, %v978
    %v980 = vpop.f32.mrf.mxu0
    %981 = vdwg.mxu0
    %v982 = vpack.c.bf16 %v935, %v935
    %983 = vmatpush.bf16.msra.mxu0 %v267
    %984 = vmatpush.bf16.msra.mxu0 %v264
    %985 = vmatpush.bf16.msra.mxu0 %v261
    %986 = vmatpush.bf16.msra.mxu0 %v258
    %987 = vmatpush.bf16.msra.mxu0 %v255
    %988 = vmatpush.bf16.msra.mxu0 %v252
    %989 = vmatpush.bf16.msra.mxu0 %v249
    %990 = vmatpush.bf16.msra.mxu0 %v246
    %991 = vmatmul.bf16.gmra.mxu0 %v982
    %v992 = vpop.f32.mrf.mxu0
    %v993 = vadd.f32 0.0, %v992
    %v994 = vpop.f32.mrf.mxu0
    %995 = vdwg.mxu0
    %996 = vmatpush.bf16.msra.mxu0 %v268
    %997 = vmatpush.bf16.msra.mxu0 %v265
    %998 = vmatpush.bf16.msra.mxu0 %v262
    %999 = vmatpush.bf16.msra.mxu0 %v259
    %1000 = vmatpush.bf16.msra.mxu0 %v256
    %1001 = vmatpush.bf16.msra.mxu0 %v253
    %1002 = vmatpush.bf16.msra.mxu0 %v250
    %1003 = vmatpush.bf16.msra.mxu0 %v247
    %1004 = vmatmul.bf16.gmra.mxu0 %v982
    %v1005 = vpop.f32.mrf.mxu0
    %v1006 = vadd.f32 0.0, %v1005
    %v1007 = vpop.f32.mrf.mxu0
    %1008 = vdwg.mxu0
    %1009 = vmatpush.bf16.msra.mxu0 %v269
    %1010 = vmatpush.bf16.msra.mxu0 %v266
    %1011 = vmatpush.bf16.msra.mxu0 %v263
    %1012 = vmatpush.bf16.msra.mxu0 %v260
    %1013 = vmatpush.bf16.msra.mxu0 %v257
    %1014 = vmatpush.bf16.msra.mxu0 %v254
    %1015 = vmatpush.bf16.msra.mxu0 %v251
    %1016 = vmatpush.bf16.msra.mxu0 %v248
    %1017 = vmatmul.bf16.gmra.mxu0 %v982
    %v1018 = vpop.f32.mrf.mxu0
    %v1019 = vadd.f32 0.0, %v1018
    %v1020 = vpop.f32.mrf.mxu0
    %1021 = vdwg.mxu0
    %v1022 = vadd.f32 %v953, %v993
    %v1023 = vxor.u32 %v1022, 2147483648
    %v1024 = vmul.f32 %v1023, 1.442695
    %v1025 = vpow.pop %v1024
    %v1026 = vadd.f32 %v1025, 1.0
    %v1027 = vrcp.pop %v1026
    %v1028 = vmul.f32 %v1026, %v1027
    %v1029 = vsub.f32 1.0, %v1028
    %v1030 = vmul.f32 %v1027, %v1029
    %v1031 = vadd.f32 %v1027, %v1030
    %vm1032 = vweird.f32 %v1026
    %vm1033 = vweird.f32 %v1027
    %vm1034 = vmor %vm1032, %vm1033
    %v1035 = vsel %vm1034, %v1027, %v1031
    %v1036 = vand.u32 2147483647, %v1026
    %vm1037 = vcmp.eq.f32.partialorder %v1036, 8.507059e+37
    %v1038 = vand.u32 %v1026, 2147483648
    %v1039 = vor.u32 1.1754944e-38, %v1038
    %v1040 = vsel %vm1037, %v1039, %v1035
    %v1041 = vmul.f32 1.0, %v1040
    %v1042 = vadd.f32 %v966, %v1006
    %v1043 = vxor.u32 %v1042, 2147483648
    %v1044 = vmul.f32 %v1043, 1.442695
    %v1045 = vpow.pop %v1044
    %v1046 = vadd.f32 %v1045, 1.0
    %v1047 = vrcp.pop %v1046
    %v1048 = vmul.f32 %v1046, %v1047
    %v1049 = vsub.f32 1.0, %v1048
    %v1050 = vmul.f32 %v1047, %v1049
    %v1051 = vadd.f32 %v1047, %v1050
    %vm1052 = vweird.f32 %v1046
    %vm1053 = vweird.f32 %v1047
    %vm1054 = vmor %vm1052, %vm1053
    %v1055 = vsel %vm1054, %v1047, %v1051
    %v1056 = vand.u32 2147483647, %v1046
    %vm1057 = vcmp.eq.f32.partialorder %v1056, 8.507059e+37
    %v1058 = vand.u32 %v1046, 2147483648
    %v1059 = vor.u32 1.1754944e-38, %v1058
    %v1060 = vsel %vm1057, %v1059, %v1055
    %v1061 = vmul.f32 1.0, %v1060
    %v1062 = vadd.f32 %v1019, %v89
    %v1063 = vmul.f32 %v1041, %v1062
    %v1064 = vadd.f32 %v979, %v1063
    %v1065 = vtanh.pop %v1064
    %v1066 = vsub.f32 1.0, %v1061
    %v1067 = vmul.f32 %v1066, %v1065
    %v1068 = vmul.f32 %v1061, %v935
    %v1069 = vadd.f32 %v1067, %v1068
    %v1070 = vld [vmem:[%s0] sm:$0x8]
    %v1071 = vld [vmem:[%s0 + $0x4] sm:$0x8]
    %v1074 = vunpack.c.l.b16 %v1070
    %v1075 = vunpack.c.l.b16 %v1071
    %v1076 = vpack.c.b16 %v1074, %v1074
    %v1077 = vpack.c.b16 %v1075, %v1075
    %v1078 = vunpack.c.l.b16 %v1076
    %v1079 = vunpack.c.l.b16 %v1077
    %v1080 = vrot.slane %v1078, 6
    %v1081 = vrot.slane %v1079, 5
    %v1082 = vsel %vm103, %v1081, %v1080
    %v1083 = vpack.c.b16 %v1082, %v1082
    %v1085 = vsel %vm122, %v1083, 0
    %1087 = vmatpush.bf16.msra.mxu0 0
    %1088 = vmatpush.bf16.msra.mxu0 0
    %1089 = vmatpush.bf16.msra.mxu0 0
    %1090 = vmatpush.bf16.msra.mxu0 0
    %1091 = vmatpush.bf16.msra.mxu0 0
    %1092 = vmatpush.bf16.msra.mxu0 0
    %1093 = vmatpush.bf16.msra.mxu0 0
    %1094 = vmatpush.bf16.msra.mxu0 %v116
    %1095 = vmatmul.bf16.gmra.mxu0 %v1085
    %v1096 = vpop.f32.mrf.mxu0
    %v1097 = vadd.f32 %v81, %v1096
    %v1098 = vpop.f32.mrf.mxu0
    %1099 = vdwg.mxu0
    %1100 = vmatpush.bf16.msra.mxu0 0
    %1101 = vmatpush.bf16.msra.mxu0 0
    %1102 = vmatpush.bf16.msra.mxu0 0
    %1103 = vmatpush.bf16.msra.mxu0 0
    %1104 = vmatpush.bf16.msra.mxu0 0
    %1105 = vmatpush.bf16.msra.mxu0 0
    %1106 = vmatpush.bf16.msra.mxu0 0
    %1107 = vmatpush.bf16.msra.mxu0 %v117
    %1108 = vmatmul.bf16.gmra.mxu0 %v1085
    %v1109 = vpop.f32.mrf.mxu0
    %v1110 = vadd.f32 %v82, %v1109
    %v1111 = vpop.f32.mrf.mxu0
    %1112 = vdwg.mxu0
    %1113 = vmatpush.bf16.msra.mxu0 0
    %1114 = vmatpush.bf16.msra.mxu0 0
    %1115 = vmatpush.bf16.msra.mxu0 0
    %1116 = vmatpush.bf16.msra.mxu0 0
    %1117 = vmatpush.bf16.msra.mxu0 0
    %1118 = vmatpush.bf16.msra.mxu0 0
    %1119 = vmatpush.bf16.msra.mxu0 0
    %1120 = vmatpush.bf16.msra.mxu0 %v118
    %1121 = vmatmul.bf16.gmra.mxu0 %v1085
    %v1122 = vpop.f32.mrf.mxu0
    %v1123 = vadd.f32 %v83, %v1122
    %v1124 = vpop.f32.mrf.mxu0
    %1125 = vdwg.mxu0
    %v1126 = vpack.c.bf16 %v1069, %v1069
    %1127 = vmatpush.bf16.msra.mxu0 %v267
    %1128 = vmatpush.bf16.msra.mxu0 %v264
    %1129 = vmatpush.bf16.msra.mxu0 %v261
    %1130 = vmatpush.bf16.msra.mxu0 %v258
    %1131 = vmatpush.bf16.msra.mxu0 %v255
    %1132 = vmatpush.bf16.msra.mxu0 %v252
    %1133 = vmatpush.bf16.msra.mxu0 %v249
    %1134 = vmatpush.bf16.msra.mxu0 %v246
    %1135 = vmatmul.bf16.gmra.mxu0 %v1126
    %v1136 = vpop.f32.mrf.mxu0
    %v1137 = vadd.f32 0.0, %v1136
    %v1138 = vpop.f32.mrf.mxu0
    %1139 = vdwg.mxu0
    %1140 = vmatpush.bf16.msra.mxu0 %v268
    %1141 = vmatpush.bf16.msra.mxu0 %v265
    %1142 = vmatpush.bf16.msra.mxu0 %v262
    %1143 = vmatpush.bf16.msra.mxu0 %v259
    %1144 = vmatpush.bf16.msra.mxu0 %v256
    %1145 = vmatpush.bf16.msra.mxu0 %v253
    %1146 = vmatpush.bf16.msra.mxu0 %v250
    %1147 = vmatpush.bf16.msra.mxu0 %v247
    %1148 = vmatmul.bf16.gmra.mxu0 %v1126
    %v1149 = vpop.f32.mrf.mxu0
    %v1150 = vadd.f32 0.0, %v1149
    %v1151 = vpop.f32.mrf.mxu0
    %1152 = vdwg.mxu0
    %1153 = vmatpush.bf16.msra.mxu0 %v269
    %1154 = vmatpush.bf16.msra.mxu0 %v266
    %1155 = vmatpush.bf16.msra.mxu0 %v263
    %1156 = vmatpush.bf16.msra.mxu0 %v260
    %1157 = vmatpush.bf16.msra.mxu0 %v257
    %1158 = vmatpush.bf16.msra.mxu0 %v254
    %1159 = vmatpush.bf16.msra.mxu0 %v251
    %1160 = vmatpush.bf16.msra.mxu0 %v248
    %1161 = vmatmul.bf16.gmra.mxu0 %v1126
    %v1162 = vpop.f32.mrf.mxu0
    %v1163 = vadd.f32 0.0, %v1162
    %v1164 = vpop.f32.mrf.mxu0
    %1165 = vdwg.mxu0
    %v1166 = vadd.f32 %v1097, %v1137
    %v1167 = vxor.u32 %v1166, 2147483648
    %v1168 = vmul.f32 %v1167, 1.442695
    %v1169 = vpow.pop %v1168
    %v1170 = vadd.f32 %v1169, 1.0
    %v1171 = vrcp.pop %v1170
    %v1172 = vmul.f32 %v1170, %v1171
    %v1173 = vsub.f32 1.0, %v1172
    %v1174 = vmul.f32 %v1171, %v1173
    %v1175 = vadd.f32 %v1171, %v1174
    %vm1176 = vweird.f32 %v1170
    %vm1177 = vweird.f32 %v1171
    %vm1178 = vmor %vm1176, %vm1177
    %v1179 = vsel %vm1178, %v1171, %v1175
    %v1180 = vand.u32 2147483647, %v1170
    %vm1181 = vcmp.eq.f32.partialorder %v1180, 8.507059e+37
    %v1182 = vand.u32 %v1170, 2147483648
    %v1183 = vor.u32 1.1754944e-38, %v1182
    %v1184 = vsel %vm1181, %v1183, %v1179
    %v1185 = vmul.f32 1.0, %v1184
    %v1186 = vadd.f32 %v1110, %v1150
    %v1187 = vxor.u32 %v1186, 2147483648
    %v1188 = vmul.f32 %v1187, 1.442695
    %v1189 = vpow.pop %v1188
    %v1190 = vadd.f32 %v1189, 1.0
    %v1191 = vrcp.pop %v1190
    %v1192 = vmul.f32 %v1190, %v1191
    %v1193 = vsub.f32 1.0, %v1192
    %v1194 = vmul.f32 %v1191, %v1193
    %v1195 = vadd.f32 %v1191, %v1194
    %vm1196 = vweird.f32 %v1190
    %vm1197 = vweird.f32 %v1191
    %vm1198 = vmor %vm1196, %vm1197
    %v1199 = vsel %vm1198, %v1191, %v1195
    %v1200 = vand.u32 2147483647, %v1190
    %vm1201 = vcmp.eq.f32.partialorder %v1200, 8.507059e+37
    %v1202 = vand.u32 %v1190, 2147483648
    %v1203 = vor.u32 1.1754944e-38, %v1202
    %v1204 = vsel %vm1201, %v1203, %v1199
    %v1205 = vmul.f32 1.0, %v1204
    %v1206 = vadd.f32 %v1163, %v89
    %v1207 = vmul.f32 %v1185, %v1206
    %v1208 = vadd.f32 %v1123, %v1207
    %v1209 = vtanh.pop %v1208
    %v1210 = vsub.f32 1.0, %v1205
    %v1211 = vmul.f32 %v1210, %v1209
    %v1212 = vmul.f32 %v1205, %v1069
    %v1213 = vadd.f32 %v1211, %v1212
    %v1214 = vrot.slane %v1078, 7
    %v1215 = vrot.slane %v1079, 6
    %v1216 = vsel %vm103, %v1215, %v1214
    %v1217 = vpack.c.b16 %v1216, %v1216
    %v1219 = vsel %vm122, %v1217, 0
    %1221 = vmatpush.bf16.msra.mxu0 0
    %1222 = vmatpush.bf16.msra.mxu0 0
    %1223 = vmatpush.bf16.msra.mxu0 0
    %1224 = vmatpush.bf16.msra.mxu0 0
    %1225 = vmatpush.bf16.msra.mxu0 0
    %1226 = vmatpush.bf16.msra.mxu0 0
    %1227 = vmatpush.bf16.msra.mxu0 0
    %1228 = vmatpush.bf16.msra.mxu0 %v116
    %1229 = vmatmul.bf16.gmra.mxu0 %v1219
    %v1230 = vpop.f32.mrf.mxu0
    %v1231 = vadd.f32 %v81, %v1230
    %v1232 = vpop.f32.mrf.mxu0
    %1233 = vdwg.mxu0
    %1234 = vmatpush.bf16.msra.mxu0 0
    %1235 = vmatpush.bf16.msra.mxu0 0
    %1236 = vmatpush.bf16.msra.mxu0 0
    %1237 = vmatpush.bf16.msra.mxu0 0
    %1238 = vmatpush.bf16.msra.mxu0 0
    %1239 = vmatpush.bf16.msra.mxu0 0
    %1240 = vmatpush.bf16.msra.mxu0 0
    %1241 = vmatpush.bf16.msra.mxu0 %v117
    %1242 = vmatmul.bf16.gmra.mxu0 %v1219
    %v1243 = vpop.f32.mrf.mxu0
    %v1244 = vadd.f32 %v82, %v1243
    %v1245 = vpop.f32.mrf.mxu0
    %1246 = vdwg.mxu0
    %1247 = vmatpush.bf16.msra.mxu0 0
    %1248 = vmatpush.bf16.msra.mxu0 0
    %1249 = vmatpush.bf16.msra.mxu0 0
    %1250 = vmatpush.bf16.msra.mxu0 0
    %1251 = vmatpush.bf16.msra.mxu0 0
    %1252 = vmatpush.bf16.msra.mxu0 0
    %1253 = vmatpush.bf16.msra.mxu0 0
    %1254 = vmatpush.bf16.msra.mxu0 %v118
    %1255 = vmatmul.bf16.gmra.mxu0 %v1219
    %v1256 = vpop.f32.mrf.mxu0
    %v1257 = vadd.f32 %v83, %v1256
    %v1258 = vpop.f32.mrf.mxu0
    %1259 = vdwg.mxu0
    %v1260 = vpack.c.bf16 %v1213, %v1213
    %1261 = vmatpush.bf16.msra.mxu0 %v267
    %1262 = vmatpush.bf16.msra.mxu0 %v264
    %1263 = vmatpush.bf16.msra.mxu0 %v261
    %1264 = vmatpush.bf16.msra.mxu0 %v258
    %1265 = vmatpush.bf16.msra.mxu0 %v255
    %1266 = vmatpush.bf16.msra.mxu0 %v252
    %1267 = vmatpush.bf16.msra.mxu0 %v249
    %1268 = vmatpush.bf16.msra.mxu0 %v246
    %1269 = vmatmul.bf16.gmra.mxu0 %v1260
    %v1270 = vpop.f32.mrf.mxu0
    %v1271 = vadd.f32 0.0, %v1270
    %v1272 = vpop.f32.mrf.mxu0
    %1273 = vdwg.mxu0
    %1274 = vmatpush.bf16.msra.mxu0 %v268
    %1275 = vmatpush.bf16.msra.mxu0 %v265
    %1276 = vmatpush.bf16.msra.mxu0 %v262
    %1277 = vmatpush.bf16.msra.mxu0 %v259
    %1278 = vmatpush.bf16.msra.mxu0 %v256
    %1279 = vmatpush.bf16.msra.mxu0 %v253
    %1280 = vmatpush.bf16.msra.mxu0 %v250
    %1281 = vmatpush.bf16.msra.mxu0 %v247
    %1282 = vmatmul.bf16.gmra.mxu0 %v1260
    %v1283 = vpop.f32.mrf.mxu0
    %v1284 = vadd.f32 0.0, %v1283
    %v1285 = vpop.f32.mrf.mxu0
    %1286 = vdwg.mxu0
    %1287 = vmatpush.bf16.msra.mxu0 %v269
    %1288 = vmatpush.bf16.msra.mxu0 %v266
    %1289 = vmatpush.bf16.msra.mxu0 %v263
    %1290 = vmatpush.bf16.msra.mxu0 %v260
    %1291 = vmatpush.bf16.msra.mxu0 %v257
    %1292 = vmatpush.bf16.msra.mxu0 %v254
    %1293 = vmatpush.bf16.msra.mxu0 %v251
    %1294 = vmatpush.bf16.msra.mxu0 %v248
    %1295 = vmatmul.bf16.gmra.mxu0 %v1260
    %v1296 = vpop.f32.mrf.mxu0
    %v1297 = vadd.f32 0.0, %v1296
    %v1298 = vpop.f32.mrf.mxu0
    %1299 = vdwg.mxu0
    %v1300 = vadd.f32 %v1231, %v1271
    %v1301 = vxor.u32 %v1300, 2147483648
    %v1302 = vmul.f32 %v1301, 1.442695
    %v1303 = vpow.pop %v1302
    %v1304 = vadd.f32 %v1303, 1.0
    %v1305 = vrcp.pop %v1304
    %v1306 = vmul.f32 %v1304, %v1305
    %v1307 = vsub.f32 1.0, %v1306
    %v1308 = vmul.f32 %v1305, %v1307
    %v1309 = vadd.f32 %v1305, %v1308
    %vm1310 = vweird.f32 %v1304
    %vm1311 = vweird.f32 %v1305
    %vm1312 = vmor %vm1310, %vm1311
    %v1313 = vsel %vm1312, %v1305, %v1309
    %v1314 = vand.u32 2147483647, %v1304
    %vm1315 = vcmp.eq.f32.partialorder %v1314, 8.507059e+37
    %v1316 = vand.u32 %v1304, 2147483648
    %v1317 = vor.u32 1.1754944e-38, %v1316
    %v1318 = vsel %vm1315, %v1317, %v1313
    %v1319 = vmul.f32 1.0, %v1318
    %v1320 = vadd.f32 %v1244, %v1284
    %v1321 = vxor.u32 %v1320, 2147483648
    %v1322 = vmul.f32 %v1321, 1.442695
    %v1323 = vpow.pop %v1322
    %v1324 = vadd.f32 %v1323, 1.0
    %v1325 = vrcp.pop %v1324
    %v1326 = vmul.f32 %v1324, %v1325
    %v1327 = vsub.f32 1.0, %v1326
    %v1328 = vmul.f32 %v1325, %v1327
    %v1329 = vadd.f32 %v1325, %v1328
    %vm1330 = vweird.f32 %v1324
    %vm1331 = vweird.f32 %v1325
    %vm1332 = vmor %vm1330, %vm1331
    %v1333 = vsel %vm1332, %v1325, %v1329
    %v1334 = vand.u32 2147483647, %v1324
    %vm1335 = vcmp.eq.f32.partialorder %v1334, 8.507059e+37
    %v1336 = vand.u32 %v1324, 2147483648
    %v1337 = vor.u32 1.1754944e-38, %v1336
    %v1338 = vsel %vm1335, %v1337, %v1333
    %v1339 = vmul.f32 1.0, %v1338
    %v1340 = vadd.f32 %v1297, %v89
    %v1341 = vmul.f32 %v1319, %v1340
    %v1342 = vadd.f32 %v1257, %v1341
    %v1343 = vtanh.pop %v1342
    %v1344 = vsub.f32 1.0, %v1339
    %v1345 = vmul.f32 %v1344, %v1343
    %v1346 = vmul.f32 %v1339, %v1213
    %v1347 = vadd.f32 %v1345, %v1346
    %1348 = vst [vmem:[#allocation2] sm:$0x3] %v1347
    // Predicated region
    $region30: #{question_embedding_forward.1} parent=1 // pred_check
      %p1349 = pneg %p38
    $region31: #{question_embedding_forward.1} parent=1 // pred_check_branch
      %1351 = sbr.rel (%p1349) target = $region33
    $region32: #{question_embedding_forward.1} parent=1 // pred_region
      %1352 = vst [vmem:[#allocation6] sm:$0x3] %v1347
    $region33: #{question_embedding_forward.1} parent=1 // pred_fallthru
      _
    // Predicated region
    $region34: #{question_embedding_forward.1} parent=1 // pred_check
      _
    $region35: #{question_embedding_forward.1} parent=1 // pred_check_branch
      %1354 = sbr.rel (0) target = $region37
    $region36: #{question_embedding_forward.1} parent=1 // pred_region
      %1356 = vsyncadd [#allocation5], 0
      %s1358 = sshll.u32 [#allocation6], 4
      %s1359 = int_to_ptr.vmem [resolvable:$true] %s1358
      %s1360 = sshll.u32 %s5, 4
      %s1361 = int_to_ptr.hbm [resolvable:$true] %s1360
      %1363 = dma.vmem_to_hbm [thread:$0]  %s1359, 32, %s1361, [#allocation5]
    $region37: #{question_embedding_forward.1} parent=1 // pred_fallthru
      _
    // Predicated region
    $region38: #{question_embedding_forward.1} parent=1 // pred_check
      _
    $region39: #{question_embedding_forward.1} parent=1 // pred_check_branch
      %1365 = sbr.rel (0) target = $region41
    $region40: #{question_embedding_forward.1} parent=1 // pred_region
      %1367 = dma.done [#allocation5], 32
    $region41: #{question_embedding_forward.1} parent=1 // pred_fallthru
      _
    %1368 = vsyncpa [#allocation4], 1
    %1369 = vsyncpa [#allocation5], 1

</llo_original>
